<compile_context>
chip_gen: v7x
topology: tpu7x:2x2x1
jax: 0.10.0
libtpu: 0.0.40
codegen_flags: <defaults>
</compile_context>

<pallas_src>
import functools

import jax
import jax.numpy as jnp
from jax import lax
from jax.experimental import pallas as pl
from jax.experimental.pallas import tpu as pltpu

# ----- "options" from the original script, chosen small & deterministic -----
INPUT_DIM = 32   # options.input_dim
FC1 = 64         # options.fc1
FC2 = 64         # options.fc2
FC3 = 32         # options.fc3
OUTPUT_DIM = 8   # options.output_dim

_FLOPS_PER_ROW = 2 * (INPUT_DIM * FC1 + FC1 * FC2 + FC2 * FC3 + FC3 * OUTPUT_DIM)
_WEIGHT_ELEMS = INPUT_DIM * FC1 + FC1 * FC2 + FC2 * FC3 + FC3 * OUTPUT_DIM
_BIAS_ELEMS = FC1 + FC2 + FC3 + OUTPUT_DIM


def _mlp_kernel(x_ref,
                w1_ref, b1_ref,
                w2_ref, b2_ref,
                w3_ref, b3_ref,
                w4t_ref, b4_ref,
                ot_ref):
    bf16 = jnp.bfloat16
    f32 = jnp.float32
    # x arrives in its original f32 layout; cast to bf16 in-kernel (avoids a
    # separate wrapper-side HBM rewrite of the whole activation tensor).
    x = x_ref[...].astype(bf16)
    # Layer 1: fc1 + ReLU   (bf16 operands, f32 accumulation, f32 bias/ReLU math)
    h = jnp.dot(x, w1_ref[...], preferred_element_type=f32)
    h = jnp.maximum(h + b1_ref[...], 0.0)
    # Layer 2: fc2 + ReLU
    h = jnp.dot(h.astype(bf16), w2_ref[...], preferred_element_type=f32)
    h = jnp.maximum(h + b2_ref[...], 0.0)
    # Layer 3: fc3 + ReLU
    h = jnp.dot(h.astype(bf16), w3_ref[...], preferred_element_type=f32)
    h = jnp.maximum(h + b3_ref[...], 0.0)
    # Layer 4 (no activation), computed transposed so the HBM store is lane-dense
    # and only M=8 rows stream through the MXU:
    #   ot[o, b] = sum_k w4t[o, k] * h[b, k]   -> (OUTPUT_DIM, tile)
    ot = lax.dot_general(
        w4t_ref[...], h.astype(bf16),
        dimension_numbers=(((1,), (1,)), ((), ())),
        preferred_element_type=f32)
    ot_ref[...] = (ot + b4_ref[...]).astype(ot_ref.dtype)


def _cores_per_chip():
    """Best-effort TensorCore count per chip (v7x=2, v5e/v6e=1). Safe fallback=1."""
    try:
        info = pltpu.get_tpu_info()
        for attr in ("num_cores", "core_count", "num_tensorcores",
                     "tensorcore_count", "num_tensor_cores"):
            v = getattr(info, attr, None)
            if isinstance(v, int) and v > 0:
                return v
    except Exception:
        pass
    return 1


def _round_up(x, m):
    return pl.cdiv(x, m) * m


@functools.partial(jax.jit, static_argnames=("tile_b",))
def mlp_forward(x, params, *, tile_b=4096):
    """Fused 4-layer MLP forward.

    x: (B, INPUT_DIM) float32. params: w1/w2/w3 as (in, out) bf16, w4t as
    (OUTPUT_DIM, FC3) bf16 (PyTorch layout), b1..b3 as (1, out) f32,
    b4 as (OUTPUT_DIM, 1) f32. Returns (B, OUTPUT_DIM) f32.
    """
    B, D = x.shape
    assert D == INPUT_DIM
    if B == 0:
        return jnp.zeros((0, OUTPUT_DIM), jnp.float32)

    # --- batch tile: as large as requested/needed, multiple of 128 (lane-dense
    # transposed output blocks).
    tile = min(tile_b, _round_up(B, 128))
    tile = max(128, (tile // 128) * 128)
    # Core-count-aware step heuristic: only shrink the tile on multi-TC chips
    # (v7x), targeting >= 2 steps per TensorCore so both cores get work and each
    # still overlaps block i+1 prefetch. Single-TC chips keep one bigger tile.
    cores = _cores_per_chip()
    if cores > 1:
        target_steps = 2 * cores
        while tile > 128 and pl.cdiv(B, tile) < target_steps:
            tile = max(128, ((tile // 2) // 128) * 128)

    # --- pad only the ragged tail (f32; fuses under jit, no full-array rewrite).
    Bp = _round_up(B, tile)
    xp = x if Bp == B else jnp.pad(x, ((0, Bp - B), (0, 0)))

    w1, b1 = params["w1"], params["b1"]
    w2, b2 = params["w2"], params["b2"]
    w3, b3 = params["w3"], params["b3"]
    w4t, b4 = params["w4t"], params["b4"]

    # Weights/biases are tiny (~34 KB total): single full-array blocks, resident
    # in VMEM across the batch grid (constant index_map -> no re-DMA per step).
    def full(shape):
        return pl.BlockSpec(shape, lambda i: (0, 0))

    bytes_accessed = (Bp * INPUT_DIM * 4      # x (f32 in)
                      + Bp * OUTPUT_DIM * 4   # out (f32, transposed)
                      + _WEIGHT_ELEMS * 2     # bf16 weights
                      + _BIAS_ELEMS * 4)      # f32 biases
    cost = pl.CostEstimate(flops=_FLOPS_PER_ROW * Bp,
                           transcendentals=0,
                           bytes_accessed=bytes_accessed)

    out_t = pl.pallas_call(
        _mlp_kernel,
        out_shape=jax.ShapeDtypeStruct((OUTPUT_DIM, Bp), jnp.float32),
        grid_spec=pltpu.PrefetchScalarGridSpec(
            num_scalar_prefetch=0,
            grid=(Bp // tile,),
            in_specs=[
                pl.BlockSpec((tile, INPUT_DIM), lambda i: (i, 0)),   # x tile
                full(w1.shape), full(b1.shape),
                full(w2.shape), full(b2.shape),
                full(w3.shape), full(b3.shape),
                full(w4t.shape), full(b4.shape),
            ],
            # Transposed output block: last dim = tile (>=128) -> unmasked stores.
            out_specs=pl.BlockSpec((OUTPUT_DIM, tile), lambda i: (0, i)),
        ),
        compiler_params=pltpu.CompilerParams(
            dimension_semantics=("parallel",)),
        cost_estimate=cost,
    )(xp, w1, b1, w2, b2, w3, b3, w4t, b4)

    # Layout plumbing back to (B, OUTPUT_DIM); fuses under jit, bytes are tiny.
    return out_t.T[:B]


def init_params(key):
    """Deterministic init mimicking PyTorch nn.Linear default (U[-k, k], k=1/sqrt(fan_in)).

    Weights are pre-cast to bf16 once (matmul operands); biases stay f32
    (added post-accumulation). w1..w3 stored as (in, out); w4 kept in PyTorch
    (out, in) layout ("w4t") so the last layer is computed directly in the
    transposed, lane-dense form.
    """
    dims = [(INPUT_DIM, FC1), (FC1, FC2), (FC2, FC3), (FC3, OUTPUT_DIM)]
    params = {}
    for idx, (fan_in, fan_out) in enumerate(dims, start=1):
        key, kw, kb = jax.random.split(key, 3)
        bound = 1.0 / (fan_in ** 0.5)
        w = jax.random.uniform(kw, (fan_in, fan_out), jnp.float32, -bound, bound)
        b = jax.random.uniform(kb, (fan_out,), jnp.float32, -bound, bound)
        if idx < 4:
            params[f"w{idx}"] = w.astype(jnp.bfloat16)
            params[f"b{idx}"] = b.reshape(1, fan_out)
        else:
            params["w4t"] = w.T.astype(jnp.bfloat16)   # (OUTPUT_DIM, FC3)
            params["b4"] = b.reshape(fan_out, 1)       # (OUTPUT_DIM, 1)
    return params


def mlp_reference(x, params):
    """Pure-JAX reference using the same bf16 data path / f32 accumulation."""
    bf16, f32 = jnp.bfloat16, jnp.float32
    h = jnp.dot(x.astype(bf16), params["w1"], preferred_element_type=f32)
    h = jnp.maximum(h + params["b1"], 0.0)
    h = jnp.dot(h.astype(bf16), params["w2"], preferred_element_type=f32)
    h = jnp.maximum(h + params["b2"], 0.0)
    h = jnp.dot(h.astype(bf16), params["w3"], preferred_element_type=f32)
    h = jnp.maximum(h + params["b3"], 0.0)
    out = jnp.dot(h.astype(bf16), params["w4t"].T, preferred_element_type=f32)
    return out + params["b4"].T


if __name__ == "__main__":
    key = jax.random.PRNGKey(0)
    key, kx = jax.random.split(key)
    batch = 500  # ragged on purpose: exercises tail padding + the [:B] slice
    x = jax.random.normal(kx, (batch, INPUT_DIM), jnp.float32)
    params = init_params(key)

    out = mlp_forward(x, params)
    out = jax.block_until_ready(out)

    ref = mlp_reference(x, params)
    assert out.shape == (batch, OUTPUT_DIM)
    assert jnp.allclose(out, ref, atol=1e-2, rtol=1e-2), (
        float(jnp.max(jnp.abs(out - ref))))
    print("KERNEL_OK")
</pallas_src>

<mosaic_0001>
module attributes {stable_mosaic.version = 11 : i64} {
  func.func @_mlp_kernel(%arg0: i32, %arg1: memref<512x32xf32, #tpu.memory_space<vmem>>, %arg2: memref<32x64xbf16, #tpu.memory_space<vmem>>, %arg3: memref<1x64xf32, #tpu.memory_space<vmem>>, %arg4: memref<64x64xbf16, #tpu.memory_space<vmem>>, %arg5: memref<1x64xf32, #tpu.memory_space<vmem>>, %arg6: memref<64x32xbf16, #tpu.memory_space<vmem>>, %arg7: memref<1x32xf32, #tpu.memory_space<vmem>>, %arg8: memref<8x32xbf16, #tpu.memory_space<vmem>>, %arg9: memref<8x1xf32, #tpu.memory_space<vmem>>, %arg10: memref<8x512xf32, #tpu.memory_space<vmem>>) attributes {dimension_semantics = [#tpu.dimension_semantics<parallel>], iteration_bounds = array<i64: 1>, scalar_prefetch = 0 : i64, scratch_operands = 0 : i64, tpu.core_type = #tpu.core_type<tc>, window_params = [{transform_indices = @transform_0, window_bounds = array<i64: 512, 32>}, {pipeline_mode = #tpu.pipeline_mode<synchronous>, transform_indices = @transform_1, window_bounds = array<i64: 32, 64>}, {pipeline_mode = #tpu.pipeline_mode<synchronous>, transform_indices = @transform_2, window_bounds = array<i64: 1, 64>}, {pipeline_mode = #tpu.pipeline_mode<synchronous>, transform_indices = @transform_3, window_bounds = array<i64: 64, 64>}, {pipeline_mode = #tpu.pipeline_mode<synchronous>, transform_indices = @transform_4, window_bounds = array<i64: 1, 64>}, {pipeline_mode = #tpu.pipeline_mode<synchronous>, transform_indices = @transform_5, window_bounds = array<i64: 64, 32>}, {pipeline_mode = #tpu.pipeline_mode<synchronous>, transform_indices = @transform_6, window_bounds = array<i64: 1, 32>}, {pipeline_mode = #tpu.pipeline_mode<synchronous>, transform_indices = @transform_7, window_bounds = array<i64: 8, 32>}, {pipeline_mode = #tpu.pipeline_mode<synchronous>, transform_indices = @transform_8, window_bounds = array<i64: 8, 1>}, {transform_indices = @transform_9, window_bounds = array<i64: 8, 512>}]} {
    %c0 = arith.constant 0 : index
    %c0_0 = arith.constant 0 : index
    %0 = vector.load %arg1[%c0, %c0_0] : memref<512x32xf32, #tpu.memory_space<vmem>>, vector<512x32xf32>
    %1 = arith.truncf %0 : vector<512x32xf32> to vector<512x32xbf16>
    %c0_1 = arith.constant 0 : index
    %c0_2 = arith.constant 0 : index
    %2 = vector.load %arg2[%c0_1, %c0_2] : memref<32x64xbf16, #tpu.memory_space<vmem>>, vector<32x64xbf16>
    %cst = arith.constant dense<0.000000e+00> : vector<512x64xf32>
    %3 = tpu.matmul %1, %2, %cst {dimension_numbers = #tpu.dot_dimension_numbers<[1], [0], [0], [1], [0, 0, 1, 1], [], []>} : vector<512x32xbf16>, vector<32x64xbf16>, vector<512x64xf32> -> vector<512x64xf32>
    %c0_3 = arith.constant 0 : index
    %c0_4 = arith.constant 0 : index
    %4 = vector.load %arg3[%c0_3, %c0_4] : memref<1x64xf32, #tpu.memory_space<vmem>>, vector<1x64xf32>
    %5 = vector.broadcast %4 : vector<1x64xf32> to vector<512x64xf32>
    %6 = arith.addf %3, %5 : vector<512x64xf32>
    %cst_5 = arith.constant 0.000000e+00 : f32
    %7 = vector.broadcast %cst_5 : f32 to vector<512x64xf32>
    %8 = arith.maximumf %6, %7 : vector<512x64xf32>
    %9 = arith.truncf %8 : vector<512x64xf32> to vector<512x64xbf16>
    %c0_6 = arith.constant 0 : index
    %c0_7 = arith.constant 0 : index
    %10 = vector.load %arg4[%c0_6, %c0_7] : memref<64x64xbf16, #tpu.memory_space<vmem>>, vector<64x64xbf16>
    %cst_8 = arith.constant dense<0.000000e+00> : vector<512x64xf32>
    %11 = tpu.matmul %9, %10, %cst_8 {dimension_numbers = #tpu.dot_dimension_numbers<[1], [0], [0], [1], [0, 0, 1, 1], [], []>} : vector<512x64xbf16>, vector<64x64xbf16>, vector<512x64xf32> -> vector<512x64xf32>
    %c0_9 = arith.constant 0 : index
    %c0_10 = arith.constant 0 : index
    %12 = vector.load %arg5[%c0_9, %c0_10] : memref<1x64xf32, #tpu.memory_space<vmem>>, vector<1x64xf32>
    %13 = vector.broadcast %12 : vector<1x64xf32> to vector<512x64xf32>
    %14 = arith.addf %11, %13 : vector<512x64xf32>
    %cst_11 = arith.constant 0.000000e+00 : f32
    %15 = vector.broadcast %cst_11 : f32 to vector<512x64xf32>
    %16 = arith.maximumf %14, %15 : vector<512x64xf32>
    %17 = arith.truncf %16 : vector<512x64xf32> to vector<512x64xbf16>
    %c0_12 = arith.constant 0 : index
    %c0_13 = arith.constant 0 : index
    %18 = vector.load %arg6[%c0_12, %c0_13] : memref<64x32xbf16, #tpu.memory_space<vmem>>, vector<64x32xbf16>
    %cst_14 = arith.constant dense<0.000000e+00> : vector<512x32xf32>
    %19 = tpu.matmul %17, %18, %cst_14 {dimension_numbers = #tpu.dot_dimension_numbers<[1], [0], [0], [1], [0, 0, 1, 1], [], []>} : vector<512x64xbf16>, vector<64x32xbf16>, vector<512x32xf32> -> vector<512x32xf32>
    %c0_15 = arith.constant 0 : index
    %c0_16 = arith.constant 0 : index
    %20 = vector.load %arg7[%c0_15, %c0_16] : memref<1x32xf32, #tpu.memory_space<vmem>>, vector<1x32xf32>
    %21 = vector.broadcast %20 : vector<1x32xf32> to vector<512x32xf32>
    %22 = arith.addf %19, %21 : vector<512x32xf32>
    %cst_17 = arith.constant 0.000000e+00 : f32
    %23 = vector.broadcast %cst_17 : f32 to vector<512x32xf32>
    %24 = arith.maximumf %22, %23 : vector<512x32xf32>
    %c0_18 = arith.constant 0 : index
    %c0_19 = arith.constant 0 : index
    %25 = vector.load %arg8[%c0_18, %c0_19] : memref<8x32xbf16, #tpu.memory_space<vmem>>, vector<8x32xbf16>
    %26 = arith.truncf %24 : vector<512x32xf32> to vector<512x32xbf16>
    %cst_20 = arith.constant dense<0.000000e+00> : vector<8x512xf32>
    %27 = tpu.matmul %25, %26, %cst_20 {dimension_numbers = #tpu.dot_dimension_numbers<[1], [1], [0], [0], [0, 0, 1, 0], [], []>} : vector<8x32xbf16>, vector<512x32xbf16>, vector<8x512xf32> -> vector<8x512xf32>
    %c0_21 = arith.constant 0 : index
    %c0_22 = arith.constant 0 : index
    %28 = vector.load %arg9[%c0_21, %c0_22] : memref<8x1xf32, #tpu.memory_space<vmem>>, vector<8x1xf32>
    %29 = vector.broadcast %28 : vector<8x1xf32> to vector<8x512xf32>
    %30 = arith.addf %27, %29 : vector<8x512xf32>
    %c0_23 = arith.constant 0 : index
    %c0_24 = arith.constant 0 : index
    %31 = vector.load %arg10[%c0_23, %c0_24] : memref<8x512xf32, #tpu.memory_space<vmem>>, vector<8x512xf32>
    tpu.vector_store %arg10[%c0_23, %c0_24], %30 {strides = array<i32>} : memref<8x512xf32, #tpu.memory_space<vmem>>, vector<8x512xf32>,
    return
  }
  func.func @transform_0(%arg0: i32) -> (i32, i32) {
    %c0_i32 = arith.constant 0 : i32
    %c0_i32_0 = arith.constant 0 : i32
    return %arg0, %c0_i32 : i32, i32
  }
  func.func @transform_1(%arg0: i32) -> (i32, i32) {
    %c0_i32 = arith.constant 0 : i32
    %c0_i32_0 = arith.constant 0 : i32
    %c0_i32_1 = arith.constant 0 : i32
    return %c0_i32, %c0_i32_0 : i32, i32
  }
  func.func @transform_2(%arg0: i32) -> (i32, i32) {
    %c0_i32 = arith.constant 0 : i32
    %c0_i32_0 = arith.constant 0 : i32
    %c0_i32_1 = arith.constant 0 : i32
    return %c0_i32, %c0_i32_0 : i32, i32
  }
  func.func @transform_3(%arg0: i32) -> (i32, i32) {
    %c0_i32 = arith.constant 0 : i32
    %c0_i32_0 = arith.constant 0 : i32
    %c0_i32_1 = arith.constant 0 : i32
    return %c0_i32, %c0_i32_0 : i32, i32
  }
  func.func @transform_4(%arg0: i32) -> (i32, i32) {
    %c0_i32 = arith.constant 0 : i32
    %c0_i32_0 = arith.constant 0 : i32
    %c0_i32_1 = arith.constant 0 : i32
    return %c0_i32, %c0_i32_0 : i32, i32
  }
  func.func @transform_5(%arg0: i32) -> (i32, i32) {
    %c0_i32 = arith.constant 0 : i32
    %c0_i32_0 = arith.constant 0 : i32
    %c0_i32_1 = arith.constant 0 : i32
    return %c0_i32, %c0_i32_0 : i32, i32
  }
  func.func @transform_6(%arg0: i32) -> (i32, i32) {
    %c0_i32 = arith.constant 0 : i32
    %c0_i32_0 = arith.constant 0 : i32
    %c0_i32_1 = arith.constant 0 : i32
    return %c0_i32, %c0_i32_0 : i32, i32
  }
  func.func @transform_7(%arg0: i32) -> (i32, i32) {
    %c0_i32 = arith.constant 0 : i32
    %c0_i32_0 = arith.constant 0 : i32
    %c0_i32_1 = arith.constant 0 : i32
    return %c0_i32, %c0_i32_0 : i32, i32
  }
  func.func @transform_8(%arg0: i32) -> (i32, i32) {
    %c0_i32 = arith.constant 0 : i32
    %c0_i32_0 = arith.constant 0 : i32
    %c0_i32_1 = arith.constant 0 : i32
    return %c0_i32, %c0_i32_0 : i32, i32
  }
  func.func @transform_9(%arg0: i32) -> (i32, i32) {
    %c0_i32 = arith.constant 0 : i32
    %c0_i32_0 = arith.constant 0 : i32
    return %c0_i32, %arg0 : i32, i32
  }
}

</mosaic_0001>

<llo_original>
// kernel: mlp_forward.1
$region0: #{mlp_forward.1}
  #allocation0 [shape = 'u32[]', space=smem, size = 0x4, offset = 0x4, fixed_abs, tag = 'smem constant byte address 0x4 - core index']
  #allocation1 [shape = 'u32[144,128]{1,0:T(1,128)}', space=vmem, size = 0x12000, scoped, tag = 'internal scratch']
  %s0 = inlined_call_operand.vmem [shape: f32[512,32], index: 0, kind: input, shape index: {}]
  %s1 = inlined_call_operand.vmem [shape: bf16[32,64], index: 1, kind: input, shape index: {}]
  %s2 = inlined_call_operand.vmem [shape: f32[1,64], index: 2, kind: input, shape index: {}]
  %s3 = inlined_call_operand.vmem [shape: bf16[64,64], index: 3, kind: input, shape index: {}]
  %s4 = inlined_call_operand.vmem [shape: f32[1,64], index: 4, kind: input, shape index: {}]
  %s5 = inlined_call_operand.vmem [shape: bf16[64,32], index: 5, kind: input, shape index: {}]
  %s6 = inlined_call_operand.vmem [shape: f32[1,32], index: 6, kind: input, shape index: {}]
  %s7 = inlined_call_operand.vmem [shape: bf16[8,32], index: 7, kind: input, shape index: {}]
  %s8 = inlined_call_operand.vmem [shape: f32[8,1], index: 8, kind: input, shape index: {}]
  %s9 = inlined_call_operand.hbm [shape: f32[8,512], index: 9, kind: output, shape index: {}]
  %s10 = sld [smem:[#allocation0]]
  $region46: #{mlp_forward.1} parent=0
    _
  %s12 = ssub.s32 1, %s10
  %s13 = scalar_select 0, %s12, %s10
  $region1: #{mlp_forward.1} parent=0
    #allocation2 [shape = 'u8[16384]{0}', space=vmem, size = 0x4000, scoped, tag = 'output window, operand 0, single buffered']
    #allocation3 [shape = 's32[1]{0}', space=sflag, size = 0x4, scoped, tag = 'scoped memory for mlp_forward.1']
    %14 = vsyncpa [#allocation3], 0
    // Predicated region
    $region2: #{mlp_forward.1} parent=1 // pred_check
      _
    $region3: #{mlp_forward.1} parent=1 // pred_check_branch
      %16 = sbr.rel (0) target = $region5
    $region4: #{mlp_forward.1} parent=1 // pred_region
      _
    $region5: #{mlp_forward.1} parent=1 // pred_fallthru
      _
    // Predicated region
    $region6: #{mlp_forward.1} parent=1 // pred_check
      _
    $region7: #{mlp_forward.1} parent=1 // pred_check_branch
      %18 = sbr.rel (0) target = $region9
    $region8: #{mlp_forward.1} parent=1 // pred_region
      _
    $region9: #{mlp_forward.1} parent=1 // pred_fallthru
      _
    // Predicated region
    $region10: #{mlp_forward.1} parent=1 // pred_check
      _
    $region11: #{mlp_forward.1} parent=1 // pred_check_branch
      %20 = sbr.rel (0) target = $region13
    $region12: #{mlp_forward.1} parent=1 // pred_region
      _
    $region13: #{mlp_forward.1} parent=1 // pred_fallthru
      _
    // Predicated region
    $region14: #{mlp_forward.1} parent=1 // pred_check
      _
    $region15: #{mlp_forward.1} parent=1 // pred_check_branch
      %22 = sbr.rel (0) target = $region17
    $region16: #{mlp_forward.1} parent=1 // pred_region
      _
    $region17: #{mlp_forward.1} parent=1 // pred_fallthru
      _
    // Predicated region
    $region18: #{mlp_forward.1} parent=1 // pred_check
      _
    $region19: #{mlp_forward.1} parent=1 // pred_check_branch
      %24 = sbr.rel (0) target = $region21
    $region20: #{mlp_forward.1} parent=1 // pred_region
      _
    $region21: #{mlp_forward.1} parent=1 // pred_fallthru
      _
    // Predicated region
    $region22: #{mlp_forward.1} parent=1 // pred_check
      _
    $region23: #{mlp_forward.1} parent=1 // pred_check_branch
      %26 = sbr.rel (0) target = $region25
    $region24: #{mlp_forward.1} parent=1 // pred_region
      _
    $region25: #{mlp_forward.1} parent=1 // pred_fallthru
      _
    // Predicated region
    $region26: #{mlp_forward.1} parent=1 // pred_check
      _
    $region27: #{mlp_forward.1} parent=1 // pred_check_branch
      %28 = sbr.rel (0) target = $region29
    $region28: #{mlp_forward.1} parent=1 // pred_region
      _
    $region29: #{mlp_forward.1} parent=1 // pred_fallthru
      _
    // Predicated region
    $region30: #{mlp_forward.1} parent=1 // pred_check
      _
    $region31: #{mlp_forward.1} parent=1 // pred_check_branch
      %30 = sbr.rel (0) target = $region33
    $region32: #{mlp_forward.1} parent=1 // pred_region
      _
    $region33: #{mlp_forward.1} parent=1 // pred_fallthru
      _
    // Predicated region
    $region34: #{mlp_forward.1} parent=1 // pred_check
      _
    $region35: #{mlp_forward.1} parent=1 // pred_check_branch
      %32 = sbr.rel (0) target = $region37
    $region36: #{mlp_forward.1} parent=1 // pred_region
      _
    $region37: #{mlp_forward.1} parent=1 // pred_fallthru
      _
    %v34 = vld [vmem:[%s0] sm:$0xff]
    %v35 = vld [vmem:[%s0 + $0x8] sm:$0xff]
    %v36 = vld [vmem:[%s0 + $0x10] sm:$0xff]
    %v37 = vld [vmem:[%s0 + $0x18] sm:$0xff]
    %v38 = vld [vmem:[%s0 + $0x20] sm:$0xff]
    %v39 = vld [vmem:[%s0 + $0x28] sm:$0xff]
    %v40 = vld [vmem:[%s0 + $0x30] sm:$0xff]
    %v41 = vld [vmem:[%s0 + $0x38] sm:$0xff]
    %v42 = vld [vmem:[%s0 + $0x40] sm:$0xff]
    %v43 = vld [vmem:[%s0 + $0x48] sm:$0xff]
    %v44 = vld [vmem:[%s0 + $0x50] sm:$0xff]
    %v45 = vld [vmem:[%s0 + $0x58] sm:$0xff]
    %v46 = vld [vmem:[%s0 + $0x60] sm:$0xff]
    %v47 = vld [vmem:[%s0 + $0x68] sm:$0xff]
    %v48 = vld [vmem:[%s0 + $0x70] sm:$0xff]
    %v49 = vld [vmem:[%s0 + $0x78] sm:$0xff]
    %v50 = vld [vmem:[%s0 + $0x80] sm:$0xff]
    %v51 = vld [vmem:[%s0 + $0x88] sm:$0xff]
    %v52 = vld [vmem:[%s0 + $0x90] sm:$0xff]
    %v53 = vld [vmem:[%s0 + $0x98] sm:$0xff]
    %v54 = vld [vmem:[%s0 + $0xa0] sm:$0xff]
    %v55 = vld [vmem:[%s0 + $0xa8] sm:$0xff]
    %v56 = vld [vmem:[%s0 + $0xb0] sm:$0xff]
    %v57 = vld [vmem:[%s0 + $0xb8] sm:$0xff]
    %v58 = vld [vmem:[%s0 + $0xc0] sm:$0xff]
    %v59 = vld [vmem:[%s0 + $0xc8] sm:$0xff]
    %v60 = vld [vmem:[%s0 + $0xd0] sm:$0xff]
    %v61 = vld [vmem:[%s0 + $0xd8] sm:$0xff]
    %v62 = vld [vmem:[%s0 + $0xe0] sm:$0xff]
    %v63 = vld [vmem:[%s0 + $0xe8] sm:$0xff]
    %v64 = vld [vmem:[%s0 + $0xf0] sm:$0xff]
    %v65 = vld [vmem:[%s0 + $0xf8] sm:$0xff]
    %v66 = vld [vmem:[%s0 + $0x100] sm:$0xff]
    %v67 = vld [vmem:[%s0 + $0x108] sm:$0xff]
    %v68 = vld [vmem:[%s0 + $0x110] sm:$0xff]
    %v69 = vld [vmem:[%s0 + $0x118] sm:$0xff]
    %v70 = vld [vmem:[%s0 + $0x120] sm:$0xff]
    %v71 = vld [vmem:[%s0 + $0x128] sm:$0xff]
    %v72 = vld [vmem:[%s0 + $0x130] sm:$0xff]
    %v73 = vld [vmem:[%s0 + $0x138] sm:$0xff]
    %v74 = vld [vmem:[%s0 + $0x140] sm:$0xff]
    %v75 = vld [vmem:[%s0 + $0x148] sm:$0xff]
    %v76 = vld [vmem:[%s0 + $0x150] sm:$0xff]
    %v77 = vld [vmem:[%s0 + $0x158] sm:$0xff]
    %v78 = vld [vmem:[%s0 + $0x160] sm:$0xff]
    %v79 = vld [vmem:[%s0 + $0x168] sm:$0xff]
    %v80 = vld [vmem:[%s0 + $0x170] sm:$0xff]
    %v81 = vld [vmem:[%s0 + $0x178] sm:$0xff]
    %v82 = vld [vmem:[%s0 + $0x180] sm:$0xff]
    %v83 = vld [vmem:[%s0 + $0x188] sm:$0xff]
    %v84 = vld [vmem:[%s0 + $0x190] sm:$0xff]
    %v85 = vld [vmem:[%s0 + $0x198] sm:$0xff]
    %v86 = vld [vmem:[%s0 + $0x1a0] sm:$0xff]
    %v87 = vld [vmem:[%s0 + $0x1a8] sm:$0xff]
    %v88 = vld [vmem:[%s0 + $0x1b0] sm:$0xff]
    %v89 = vld [vmem:[%s0 + $0x1b8] sm:$0xff]
    %v90 = vld [vmem:[%s0 + $0x1c0] sm:$0xff]
    %v91 = vld [vmem:[%s0 + $0x1c8] sm:$0xff]
    %v92 = vld [vmem:[%s0 + $0x1d0] sm:$0xff]
    %v93 = vld [vmem:[%s0 + $0x1d8] sm:$0xff]
    %v94 = vld [vmem:[%s0 + $0x1e0] sm:$0xff]
    %v95 = vld [vmem:[%s0 + $0x1e8] sm:$0xff]
    %v96 = vld [vmem:[%s0 + $0x1f0] sm:$0xff]
    %v97 = vld [vmem:[%s0 + $0x1f8] sm:$0xff]
    %v98 = vpack.c.bf16 %v35, %v34
    %v99 = vpack.c.bf16 %v37, %v36
    %v100 = vpack.c.bf16 %v39, %v38
    %v101 = vpack.c.bf16 %v41, %v40
    %v102 = vpack.c.bf16 %v43, %v42
    %v103 = vpack.c.bf16 %v45, %v44
    %v104 = vpack.c.bf16 %v47, %v46
    %v105 = vpack.c.bf16 %v49, %v48
    %v106 = vpack.c.bf16 %v51, %v50
    %v107 = vpack.c.bf16 %v53, %v52
    %v108 = vpack.c.bf16 %v55, %v54
    %v109 = vpack.c.bf16 %v57, %v56
    %v110 = vpack.c.bf16 %v59, %v58
    %v111 = vpack.c.bf16 %v61, %v60
    %v112 = vpack.c.bf16 %v63, %v62
    %v113 = vpack.c.bf16 %v65, %v64
    %v114 = vpack.c.bf16 %v67, %v66
    %v115 = vpack.c.bf16 %v69, %v68
    %v116 = vpack.c.bf16 %v71, %v70
    %v117 = vpack.c.bf16 %v73, %v72
    %v118 = vpack.c.bf16 %v75, %v74
    %v119 = vpack.c.bf16 %v77, %v76
    %v120 = vpack.c.bf16 %v79, %v78
    %v121 = vpack.c.bf16 %v81, %v80
    %v122 = vpack.c.bf16 %v83, %v82
    %v123 = vpack.c.bf16 %v85, %v84
    %v124 = vpack.c.bf16 %v87, %v86
    %v125 = vpack.c.bf16 %v89, %v88
    %v126 = vpack.c.bf16 %v91, %v90
    %v127 = vpack.c.bf16 %v93, %v92
    %v128 = vpack.c.bf16 %v95, %v94
    %v129 = vpack.c.bf16 %v97, %v96
    %v130 = vld [vmem:[%s1] sm:$0xf]
    %v131 = vld [vmem:[%s1 + $0x4] sm:$0xf]
    %v132 = vld [vmem:[%s1 + $0x8] sm:$0xf]
    %v133 = vld [vmem:[%s1 + $0xc] sm:$0xf]
    %v134 = vld [vmem:[%s2] sm:$0x1]
    %v136 = vlaneseq
    %v137 = vshrl.u32 %v136, 7
    %v138 = vsub.s32 0, %v137
    %v139 = vrot.slane %v134, %v138
    %v145 = vunpack.c.l.b16 %v130
    %v146 = vunpack.c.l.b16 %v131
    %v147 = vunpack.c.l.b16 %v132
    %v148 = vunpack.c.l.b16 %v133
    %v149 = vpack.c.b16 %v146, %v145
    %v150 = vpack.c.b16 %v148, %v147
    %vm153 = vcmask 261120
    %v155 = vsel %vm153, %v98, 0
    %v158 = vsel %vm153, %v99, 0
    %v161 = vsel %vm153, %v100, 0
    %v164 = vsel %vm153, %v101, 0
    %v167 = vsel %vm153, %v102, 0
    %v170 = vsel %vm153, %v103, 0
    %v173 = vsel %vm153, %v104, 0
    %v176 = vsel %vm153, %v105, 0
    %v179 = vsel %vm153, %v106, 0
    %v182 = vsel %vm153, %v107, 0
    %v185 = vsel %vm153, %v108, 0
    %v188 = vsel %vm153, %v109, 0
    %v191 = vsel %vm153, %v110, 0
    %v194 = vsel %vm153, %v111, 0
    %v197 = vsel %vm153, %v112, 0
    %v200 = vsel %vm153, %v113, 0
    %v203 = vsel %vm153, %v114, 0
    %v206 = vsel %vm153, %v115, 0
    %v209 = vsel %vm153, %v116, 0
    %v212 = vsel %vm153, %v117, 0
    %v215 = vsel %vm153, %v118, 0
    %v218 = vsel %vm153, %v119, 0
    %v221 = vsel %vm153, %v120, 0
    %v224 = vsel %vm153, %v121, 0
    %v227 = vsel %vm153, %v122, 0
    %v230 = vsel %vm153, %v123, 0
    %v233 = vsel %vm153, %v124, 0
    %v236 = vsel %vm153, %v125, 0
    %v239 = vsel %vm153, %v126, 0
    %v242 = vsel %vm153, %v127, 0
    %v245 = vsel %vm153, %v128, 0
    %v248 = vsel %vm153, %v129, 0
    %250 = vmatprep.subr.bf16.mxu0 0
    %251 = vmatpush1.bf16.msra.mxu0 %v149
    %252 = vmatprep.subr.bf16.mxu0 0
    %253 = vmatpush1.bf16.msra.mxu0 %v150
    %254 = vmatprep.subr.bf16.mxu0 0
    %255 = vmatpush1.bf16.msra.mxu0 0
    %256 = vmatprep.subr.bf16.mxu0 0
    %257 = vmatpush1.bf16.msra.mxu0 0
    %258 = vmatprep.subr.bf16.mxu0 0
    %259 = vmatpush1.bf16.msra.mxu0 0
    %260 = vmatprep.subr.bf16.mxu0 0
    %261 = vmatpush1.bf16.msra.mxu0 0
    %262 = vmatprep.subr.bf16.mxu0 0
    %263 = vmatpush1.bf16.msra.mxu0 0
    %264 = vmatprep.subr.bf16.mxu0 0
    %265 = vmatpush1.bf16.msra.mxu0 0
    %266 = vmatprep.subr.bf16.mxu0 0
    %267 = vmatpush1.bf16.msra.mxu0 0
    %268 = vmatprep.subr.bf16.mxu0 0
    %269 = vmatpush1.bf16.msra.mxu0 0
    %270 = vmatprep.subr.bf16.mxu0 0
    %271 = vmatpush1.bf16.msra.mxu0 0
    %272 = vmatprep.subr.bf16.mxu0 0
    %273 = vmatpush1.bf16.msra.mxu0 0
    %274 = vmatprep.subr.bf16.mxu0 0
    %275 = vmatpush1.bf16.msra.mxu0 0
    %276 = vmatprep.subr.bf16.mxu0 0
    %277 = vmatpush1.bf16.msra.mxu0 0
    %278 = vmatprep.subr.bf16.mxu0 0
    %279 = vmatpush1.bf16.msra.mxu0 0
    %280 = vmatprep.subr.bf16.mxu0 0
    %281 = vmatpush1.bf16.msra.mxu0 0
    %282 = vmatprep.mubr.bf16.mxu0 0
    %283 = vmatmul.mubr.bf16.gmra.mrb[0].mxu0 %v155
    %v284 = vpop.f32.mrb[0].mxu0
    %v285 = vadd.f32 %v139, %v284
    %v286 = vpop.f32.mrb[0].mxu0
    %v287 = vpop.f32.mrb[0].mxu0
    %v288 = vadd.f32 %v139, %v287
    %v289 = vpop.f32.mrb[0].mxu0
    %290 = vmatprep.mubr.bf16.mxu0 0
    %291 = vmatmul.mubr.bf16.gmra.mrb[0].mxu0 %v158
    %v292 = vpop.f32.mrb[0].mxu0
    %v293 = vadd.f32 %v139, %v292
    %v294 = vpop.f32.mrb[0].mxu0
    %v295 = vpop.f32.mrb[0].mxu0
    %v296 = vadd.f32 %v139, %v295
    %v297 = vpop.f32.mrb[0].mxu0
    %298 = vmatprep.mubr.bf16.mxu0 0
    %299 = vmatmul.mubr.bf16.gmra.mrb[0].mxu0 %v161
    %v300 = vpop.f32.mrb[0].mxu0
    %v301 = vadd.f32 %v139, %v300
    %v302 = vpop.f32.mrb[0].mxu0
    %v303 = vpop.f32.mrb[0].mxu0
    %v304 = vadd.f32 %v139, %v303
    %v305 = vpop.f32.mrb[0].mxu0
    %306 = vmatprep.mubr.bf16.mxu0 0
    %307 = vmatmul.mubr.bf16.gmra.mrb[0].mxu0 %v164
    %v308 = vpop.f32.mrb[0].mxu0
    %v309 = vadd.f32 %v139, %v308
    %v310 = vpop.f32.mrb[0].mxu0
    %v311 = vpop.f32.mrb[0].mxu0
    %v312 = vadd.f32 %v139, %v311
    %v313 = vpop.f32.mrb[0].mxu0
    %314 = vmatprep.mubr.bf16.mxu0 0
    %315 = vmatmul.mubr.bf16.gmra.mrb[0].mxu0 %v167
    %v316 = vpop.f32.mrb[0].mxu0
    %v317 = vadd.f32 %v139, %v316
    %v318 = vpop.f32.mrb[0].mxu0
    %v319 = vpop.f32.mrb[0].mxu0
    %v320 = vadd.f32 %v139, %v319
    %v321 = vpop.f32.mrb[0].mxu0
    %322 = vmatprep.mubr.bf16.mxu0 0
    %323 = vmatmul.mubr.bf16.gmra.mrb[0].mxu0 %v170
    %v324 = vpop.f32.mrb[0].mxu0
    %v325 = vadd.f32 %v139, %v324
    %v326 = vpop.f32.mrb[0].mxu0
    %v327 = vpop.f32.mrb[0].mxu0
    %v328 = vadd.f32 %v139, %v327
    %v329 = vpop.f32.mrb[0].mxu0
    %330 = vmatprep.mubr.bf16.mxu0 0
    %331 = vmatmul.mubr.bf16.gmra.mrb[0].mxu0 %v173
    %v332 = vpop.f32.mrb[0].mxu0
    %v333 = vadd.f32 %v139, %v332
    %v334 = vpop.f32.mrb[0].mxu0
    %v335 = vpop.f32.mrb[0].mxu0
    %v336 = vadd.f32 %v139, %v335
    %v337 = vpop.f32.mrb[0].mxu0
    %338 = vmatprep.mubr.bf16.mxu0 0
    %339 = vmatmul.mubr.bf16.gmra.mrb[0].mxu0 %v176
    %v340 = vpop.f32.mrb[0].mxu0
    %v341 = vadd.f32 %v139, %v340
    %v342 = vpop.f32.mrb[0].mxu0
    %v343 = vpop.f32.mrb[0].mxu0
    %v344 = vadd.f32 %v139, %v343
    %v345 = vpop.f32.mrb[0].mxu0
    %346 = vmatprep.mubr.bf16.mxu0 0
    %347 = vmatmul.mubr.bf16.gmra.mrb[0].mxu0 %v179
    %v348 = vpop.f32.mrb[0].mxu0
    %v349 = vadd.f32 %v139, %v348
    %v350 = vpop.f32.mrb[0].mxu0
    %v351 = vpop.f32.mrb[0].mxu0
    %v352 = vadd.f32 %v139, %v351
    %v353 = vpop.f32.mrb[0].mxu0
    %354 = vmatprep.mubr.bf16.mxu0 0
    %355 = vmatmul.mubr.bf16.gmra.mrb[0].mxu0 %v182
    %v356 = vpop.f32.mrb[0].mxu0
    %v357 = vadd.f32 %v139, %v356
    %v358 = vpop.f32.mrb[0].mxu0
    %v359 = vpop.f32.mrb[0].mxu0
    %v360 = vadd.f32 %v139, %v359
    %v361 = vpop.f32.mrb[0].mxu0
    %362 = vmatprep.mubr.bf16.mxu0 0
    %363 = vmatmul.mubr.bf16.gmra.mrb[0].mxu0 %v185
    %v364 = vpop.f32.mrb[0].mxu0
    %v365 = vadd.f32 %v139, %v364
    %v366 = vpop.f32.mrb[0].mxu0
    %v367 = vpop.f32.mrb[0].mxu0
    %v368 = vadd.f32 %v139, %v367
    %v369 = vpop.f32.mrb[0].mxu0
    %370 = vmatprep.mubr.bf16.mxu0 0
    %371 = vmatmul.mubr.bf16.gmra.mrb[0].mxu0 %v188
    %v372 = vpop.f32.mrb[0].mxu0
    %v373 = vadd.f32 %v139, %v372
    %v374 = vpop.f32.mrb[0].mxu0
    %v375 = vpop.f32.mrb[0].mxu0
    %v376 = vadd.f32 %v139, %v375
    %v377 = vpop.f32.mrb[0].mxu0
    %378 = vmatprep.mubr.bf16.mxu0 0
    %379 = vmatmul.mubr.bf16.gmra.mrb[0].mxu0 %v191
    %v380 = vpop.f32.mrb[0].mxu0
    %v381 = vadd.f32 %v139, %v380
    %v382 = vpop.f32.mrb[0].mxu0
    %v383 = vpop.f32.mrb[0].mxu0
    %v384 = vadd.f32 %v139, %v383
    %v385 = vpop.f32.mrb[0].mxu0
    %386 = vmatprep.mubr.bf16.mxu0 0
    %387 = vmatmul.mubr.bf16.gmra.mrb[0].mxu0 %v194
    %v388 = vpop.f32.mrb[0].mxu0
    %v389 = vadd.f32 %v139, %v388
    %v390 = vpop.f32.mrb[0].mxu0
    %v391 = vpop.f32.mrb[0].mxu0
    %v392 = vadd.f32 %v139, %v391
    %v393 = vpop.f32.mrb[0].mxu0
    %394 = vmatprep.mubr.bf16.mxu0 0
    %395 = vmatmul.mubr.bf16.gmra.mrb[0].mxu0 %v197
    %v396 = vpop.f32.mrb[0].mxu0
    %v397 = vadd.f32 %v139, %v396
    %v398 = vpop.f32.mrb[0].mxu0
    %v399 = vpop.f32.mrb[0].mxu0
    %v400 = vadd.f32 %v139, %v399
    %v401 = vpop.f32.mrb[0].mxu0
    %402 = vmatprep.mubr.bf16.mxu0 0
    %403 = vmatmul.mubr.bf16.gmra.mrb[0].mxu0 %v200
    %v404 = vpop.f32.mrb[0].mxu0
    %v405 = vadd.f32 %v139, %v404
    %v406 = vpop.f32.mrb[0].mxu0
    %v407 = vpop.f32.mrb[0].mxu0
    %v408 = vadd.f32 %v139, %v407
    %v409 = vpop.f32.mrb[0].mxu0
    %410 = vmatprep.mubr.bf16.mxu0 0
    %411 = vmatmul.mubr.bf16.gmra.mrb[0].mxu0 %v203
    %v412 = vpop.f32.mrb[0].mxu0
    %v413 = vadd.f32 %v139, %v412
    %v414 = vpop.f32.mrb[0].mxu0
    %v415 = vpop.f32.mrb[0].mxu0
    %v416 = vadd.f32 %v139, %v415
    %v417 = vpop.f32.mrb[0].mxu0
    %418 = vmatprep.mubr.bf16.mxu0 0
    %419 = vmatmul.mubr.bf16.gmra.mrb[0].mxu0 %v206
    %v420 = vpop.f32.mrb[0].mxu0
    %v421 = vadd.f32 %v139, %v420
    %v422 = vpop.f32.mrb[0].mxu0
    %v423 = vpop.f32.mrb[0].mxu0
    %v424 = vadd.f32 %v139, %v423
    %v425 = vpop.f32.mrb[0].mxu0
    %426 = vmatprep.mubr.bf16.mxu0 0
    %427 = vmatmul.mubr.bf16.gmra.mrb[0].mxu0 %v209
    %v428 = vpop.f32.mrb[0].mxu0
    %v429 = vadd.f32 %v139, %v428
    %v430 = vpop.f32.mrb[0].mxu0
    %v431 = vpop.f32.mrb[0].mxu0
    %v432 = vadd.f32 %v139, %v431
    %v433 = vpop.f32.mrb[0].mxu0
    %434 = vmatprep.mubr.bf16.mxu0 0
    %435 = vmatmul.mubr.bf16.gmra.mrb[0].mxu0 %v212
    %v436 = vpop.f32.mrb[0].mxu0
    %v437 = vadd.f32 %v139, %v436
    %v438 = vpop.f32.mrb[0].mxu0
    %v439 = vpop.f32.mrb[0].mxu0
    %v440 = vadd.f32 %v139, %v439
    %v441 = vpop.f32.mrb[0].mxu0
    %442 = vmatprep.mubr.bf16.mxu0 0
    %443 = vmatmul.mubr.bf16.gmra.mrb[0].mxu0 %v215
    %v444 = vpop.f32.mrb[0].mxu0
    %v445 = vadd.f32 %v139, %v444
    %v446 = vpop.f32.mrb[0].mxu0
    %v447 = vpop.f32.mrb[0].mxu0
    %v448 = vadd.f32 %v139, %v447
    %v449 = vpop.f32.mrb[0].mxu0
    %450 = vmatprep.mubr.bf16.mxu0 0
    %451 = vmatmul.mubr.bf16.gmra.mrb[0].mxu0 %v218
    %v452 = vpop.f32.mrb[0].mxu0
    %v453 = vadd.f32 %v139, %v452
    %v454 = vpop.f32.mrb[0].mxu0
    %v455 = vpop.f32.mrb[0].mxu0
    %v456 = vadd.f32 %v139, %v455
    %v457 = vpop.f32.mrb[0].mxu0
    %458 = vmatprep.mubr.bf16.mxu0 0
    %459 = vmatmul.mubr.bf16.gmra.mrb[0].mxu0 %v221
    %v460 = vpop.f32.mrb[0].mxu0
    %v461 = vadd.f32 %v139, %v460
    %v462 = vpop.f32.mrb[0].mxu0
    %v463 = vpop.f32.mrb[0].mxu0
    %v464 = vadd.f32 %v139, %v463
    %v465 = vpop.f32.mrb[0].mxu0
    %466 = vmatprep.mubr.bf16.mxu0 0
    %467 = vmatmul.mubr.bf16.gmra.mrb[0].mxu0 %v224
    %v468 = vpop.f32.mrb[0].mxu0
    %v469 = vadd.f32 %v139, %v468
    %v470 = vpop.f32.mrb[0].mxu0
    %v471 = vpop.f32.mrb[0].mxu0
    %v472 = vadd.f32 %v139, %v471
    %v473 = vpop.f32.mrb[0].mxu0
    %474 = vmatprep.mubr.bf16.mxu0 0
    %475 = vmatmul.mubr.bf16.gmra.mrb[0].mxu0 %v227
    %v476 = vpop.f32.mrb[0].mxu0
    %v477 = vadd.f32 %v139, %v476
    %v478 = vpop.f32.mrb[0].mxu0
    %v479 = vpop.f32.mrb[0].mxu0
    %v480 = vadd.f32 %v139, %v479
    %v481 = vpop.f32.mrb[0].mxu0
    %482 = vmatprep.mubr.bf16.mxu0 0
    %483 = vmatmul.mubr.bf16.gmra.mrb[0].mxu0 %v230
    %v484 = vpop.f32.mrb[0].mxu0
    %v485 = vadd.f32 %v139, %v484
    %v486 = vpop.f32.mrb[0].mxu0
    %v487 = vpop.f32.mrb[0].mxu0
    %v488 = vadd.f32 %v139, %v487
    %v489 = vpop.f32.mrb[0].mxu0
    %490 = vmatprep.mubr.bf16.mxu0 0
    %491 = vmatmul.mubr.bf16.gmra.mrb[0].mxu0 %v233
    %v492 = vpop.f32.mrb[0].mxu0
    %v493 = vadd.f32 %v139, %v492
    %v494 = vpop.f32.mrb[0].mxu0
    %v495 = vpop.f32.mrb[0].mxu0
    %v496 = vadd.f32 %v139, %v495
    %v497 = vpop.f32.mrb[0].mxu0
    %498 = vmatprep.mubr.bf16.mxu0 0
    %499 = vmatmul.mubr.bf16.gmra.mrb[0].mxu0 %v236
    %v500 = vpop.f32.mrb[0].mxu0
    %v501 = vadd.f32 %v139, %v500
    %v502 = vpop.f32.mrb[0].mxu0
    %v503 = vpop.f32.mrb[0].mxu0
    %v504 = vadd.f32 %v139, %v503
    %v505 = vpop.f32.mrb[0].mxu0
    %506 = vmatprep.mubr.bf16.mxu0 0
    %507 = vmatmul.mubr.bf16.gmra.mrb[0].mxu0 %v239
    %v508 = vpop.f32.mrb[0].mxu0
    %v509 = vadd.f32 %v139, %v508
    %v510 = vpop.f32.mrb[0].mxu0
    %v511 = vpop.f32.mrb[0].mxu0
    %v512 = vadd.f32 %v139, %v511
    %v513 = vpop.f32.mrb[0].mxu0
    %514 = vmatprep.mubr.bf16.mxu0 0
    %515 = vmatmul.mubr.bf16.gmra.mrb[0].mxu0 %v242
    %v516 = vpop.f32.mrb[0].mxu0
    %v517 = vadd.f32 %v139, %v516
    %v518 = vpop.f32.mrb[0].mxu0
    %v519 = vpop.f32.mrb[0].mxu0
    %v520 = vadd.f32 %v139, %v519
    %v521 = vpop.f32.mrb[0].mxu0
    %522 = vmatprep.mubr.bf16.mxu0 0
    %523 = vmatmul.mubr.bf16.gmra.mrb[0].mxu0 %v245
    %v524 = vpop.f32.mrb[0].mxu0
    %v525 = vadd.f32 %v139, %v524
    %v526 = vpop.f32.mrb[0].mxu0
    %v527 = vpop.f32.mrb[0].mxu0
    %v528 = vadd.f32 %v139, %v527
    %v529 = vpop.f32.mrb[0].mxu0
    %530 = vmatprep.mubr.bf16.mxu0 0
    %531 = vmatmul.mubr.bf16.gmra.mrb[0].mxu0 %v248
    %v532 = vpop.f32.mrb[0].mxu0
    %v533 = vadd.f32 %v139, %v532
    %v534 = vpop.f32.mrb[0].mxu0
    %v535 = vpop.f32.mrb[0].mxu0
    %v536 = vadd.f32 %v139, %v535
    %v537 = vpop.f32.mrb[0].mxu0
    %538 = vdwg.mxu0
    %v539 = vmax.f32 %v285, 0.0
    %v540 = vmax.f32 %v288, 0.0
    %v541 = vmax.f32 %v293, 0.0
    %v542 = vmax.f32 %v296, 0.0
    %v543 = vmax.f32 %v301, 0.0
    %v544 = vmax.f32 %v304, 0.0
    %v545 = vmax.f32 %v309, 0.0
    %v546 = vmax.f32 %v312, 0.0
    %v547 = vmax.f32 %v317, 0.0
    %v548 = vmax.f32 %v320, 0.0
    %v549 = vmax.f32 %v325, 0.0
    %v550 = vmax.f32 %v328, 0.0
    %v551 = vmax.f32 %v333, 0.0
    %v552 = vmax.f32 %v336, 0.0
    %v553 = vmax.f32 %v341, 0.0
    %v554 = vmax.f32 %v344, 0.0
    %v555 = vmax.f32 %v349, 0.0
    %v556 = vmax.f32 %v352, 0.0
    %v557 = vmax.f32 %v357, 0.0
    %v558 = vmax.f32 %v360, 0.0
    %v559 = vmax.f32 %v365, 0.0
    %v560 = vmax.f32 %v368, 0.0
    %v561 = vmax.f32 %v373, 0.0
    %v562 = vmax.f32 %v376, 0.0
    %v563 = vmax.f32 %v381, 0.0
    %v564 = vmax.f32 %v384, 0.0
    %v565 = vmax.f32 %v389, 0.0
    %v566 = vmax.f32 %v392, 0.0
    %v567 = vmax.f32 %v397, 0.0
    %v568 = vmax.f32 %v400, 0.0
    %v569 = vmax.f32 %v405, 0.0
    %v570 = vmax.f32 %v408, 0.0
    %v571 = vmax.f32 %v413, 0.0
    %v572 = vmax.f32 %v416, 0.0
    %v573 = vmax.f32 %v421, 0.0
    %v574 = vmax.f32 %v424, 0.0
    %v575 = vmax.f32 %v429, 0.0
    %v576 = vmax.f32 %v432, 0.0
    %v577 = vmax.f32 %v437, 0.0
    %v578 = vmax.f32 %v440, 0.0
    %v579 = vmax.f32 %v445, 0.0
    %v580 = vmax.f32 %v448, 0.0
    %v581 = vmax.f32 %v453, 0.0
    %v582 = vmax.f32 %v456, 0.0
    %v583 = vmax.f32 %v461, 0.0
    %v584 = vmax.f32 %v464, 0.0
    %v585 = vmax.f32 %v469, 0.0
    %v586 = vmax.f32 %v472, 0.0
    %v587 = vmax.f32 %v477, 0.0
    %v588 = vmax.f32 %v480, 0.0
    %v589 = vmax.f32 %v485, 0.0
    %v590 = vmax.f32 %v488, 0.0
    %v591 = vmax.f32 %v493, 0.0
    %v592 = vmax.f32 %v496, 0.0
    %v593 = vmax.f32 %v501, 0.0
    %v594 = vmax.f32 %v504, 0.0
    %v595 = vmax.f32 %v509, 0.0
    %v596 = vmax.f32 %v512, 0.0
    %v597 = vmax.f32 %v517, 0.0
    %v598 = vmax.f32 %v520, 0.0
    %v599 = vmax.f32 %v525, 0.0
    %v600 = vmax.f32 %v528, 0.0
    %v601 = vmax.f32 %v533, 0.0
    %v602 = vmax.f32 %v536, 0.0
    %v603 = vpack.c.bf16 %v540, %v539
    %v604 = vpack.c.bf16 %v542, %v541
    %v605 = vpack.c.bf16 %v544, %v543
    %v606 = vpack.c.bf16 %v546, %v545
    %v607 = vpack.c.bf16 %v548, %v547
    %v608 = vpack.c.bf16 %v550, %v549
    %v609 = vpack.c.bf16 %v552, %v551
    %v610 = vpack.c.bf16 %v554, %v553
    %v611 = vpack.c.bf16 %v556, %v555
    %v612 = vpack.c.bf16 %v558, %v557
    %v613 = vpack.c.bf16 %v560, %v559
    %v614 = vpack.c.bf16 %v562, %v561
    %v615 = vpack.c.bf16 %v564, %v563
    %v616 = vpack.c.bf16 %v566, %v565
    %v617 = vpack.c.bf16 %v568, %v567
    %v618 = vpack.c.bf16 %v570, %v569
    %v619 = vpack.c.bf16 %v572, %v571
    %v620 = vpack.c.bf16 %v574, %v573
    %v621 = vpack.c.bf16 %v576, %v575
    %v622 = vpack.c.bf16 %v578, %v577
    %v623 = vpack.c.bf16 %v580, %v579
    %v624 = vpack.c.bf16 %v582, %v581
    %v625 = vpack.c.bf16 %v584, %v583
    %v626 = vpack.c.bf16 %v586, %v585
    %v627 = vpack.c.bf16 %v588, %v587
    %v628 = vpack.c.bf16 %v590, %v589
    %v629 = vpack.c.bf16 %v592, %v591
    %v630 = vpack.c.bf16 %v594, %v593
    %v631 = vpack.c.bf16 %v596, %v595
    %v632 = vpack.c.bf16 %v598, %v597
    %v633 = vpack.c.bf16 %v600, %v599
    %v634 = vpack.c.bf16 %v602, %v601
    %v635 = vld [vmem:[%s3] sm:$0xf]
    %v636 = vld [vmem:[%s3 + $0x4] sm:$0xf]
    %v637 = vld [vmem:[%s3 + $0x8] sm:$0xf]
    %v638 = vld [vmem:[%s3 + $0xc] sm:$0xf]
    %v639 = vld [vmem:[%s3 + $0x10] sm:$0xf]
    %v640 = vld [vmem:[%s3 + $0x14] sm:$0xf]
    %v641 = vld [vmem:[%s3 + $0x18] sm:$0xf]
    %v642 = vld [vmem:[%s3 + $0x1c] sm:$0xf]
    %v643 = vld [vmem:[%s4] sm:$0x1]
    %v645 = vlaneseq
    %v646 = vshrl.u32 %v645, 7
    %v647 = vsub.s32 0, %v646
    %v648 = vrot.slane %v643, %v647
    %v658 = vunpack.c.l.b16 %v635
    %v659 = vunpack.c.l.b16 %v636
    %v660 = vunpack.c.l.b16 %v637
    %v661 = vunpack.c.l.b16 %v638
    %v662 = vunpack.c.l.b16 %v639
    %v663 = vunpack.c.l.b16 %v640
    %v664 = vunpack.c.l.b16 %v641
    %v665 = vunpack.c.l.b16 %v642
    %v666 = vpack.c.b16 %v659, %v658
    %v667 = vpack.c.b16 %v661, %v660
    %v668 = vpack.c.b16 %v663, %v662
    %v669 = vpack.c.b16 %v665, %v664
    %vm674 = vcmask 523264
    %v676 = vsel %vm674, %v603, 0
    %v679 = vsel %vm674, %v604, 0
    %v682 = vsel %vm674, %v605, 0
    %v685 = vsel %vm674, %v606, 0
    %v688 = vsel %vm674, %v607, 0
    %v691 = vsel %vm674, %v608, 0
    %v694 = vsel %vm674, %v609, 0
    %v697 = vsel %vm674, %v610, 0
    %v700 = vsel %vm674, %v611, 0
    %v703 = vsel %vm674, %v612, 0
    %v706 = vsel %vm674, %v613, 0
    %v709 = vsel %vm674, %v614, 0
    %v712 = vsel %vm674, %v615, 0
    %v715 = vsel %vm674, %v616, 0
    %v718 = vsel %vm674, %v617, 0
    %v721 = vsel %vm674, %v618, 0
    %v724 = vsel %vm674, %v619, 0
    %v727 = vsel %vm674, %v620, 0
    %v730 = vsel %vm674, %v621, 0
    %v733 = vsel %vm674, %v622, 0
    %v736 = vsel %vm674, %v623, 0
    %v739 = vsel %vm674, %v624, 0
    %v742 = vsel %vm674, %v625, 0
    %v745 = vsel %vm674, %v626, 0
    %v748 = vsel %vm674, %v627, 0
    %v751 = vsel %vm674, %v628, 0
    %v754 = vsel %vm674, %v629, 0
    %v757 = vsel %vm674, %v630, 0
    %v760 = vsel %vm674, %v631, 0
    %v763 = vsel %vm674, %v632, 0
    %v766 = vsel %vm674, %v633, 0
    %v769 = vsel %vm674, %v634, 0
    %771 = vmatprep.subr.bf16.mxu0 0
    %772 = vmatpush1.bf16.msra.mxu0 %v666
    %773 = vmatprep.subr.bf16.mxu0 0
    %774 = vmatpush1.bf16.msra.mxu0 %v667
    %775 = vmatprep.subr.bf16.mxu0 0
    %776 = vmatpush1.bf16.msra.mxu0 %v668
    %777 = vmatprep.subr.bf16.mxu0 0
    %778 = vmatpush1.bf16.msra.mxu0 %v669
    %779 = vmatprep.subr.bf16.mxu0 0
    %780 = vmatpush1.bf16.msra.mxu0 0
    %781 = vmatprep.subr.bf16.mxu0 0
    %782 = vmatpush1.bf16.msra.mxu0 0
    %783 = vmatprep.subr.bf16.mxu0 0
    %784 = vmatpush1.bf16.msra.mxu0 0
    %785 = vmatprep.subr.bf16.mxu0 0
    %786 = vmatpush1.bf16.msra.mxu0 0
    %787 = vmatprep.subr.bf16.mxu0 0
    %788 = vmatpush1.bf16.msra.mxu0 0
    %789 = vmatprep.subr.bf16.mxu0 0
    %790 = vmatpush1.bf16.msra.mxu0 0
    %791 = vmatprep.subr.bf16.mxu0 0
    %792 = vmatpush1.bf16.msra.mxu0 0
    %793 = vmatprep.subr.bf16.mxu0 0
    %794 = vmatpush1.bf16.msra.mxu0 0
    %795 = vmatprep.subr.bf16.mxu0 0
    %796 = vmatpush1.bf16.msra.mxu0 0
    %797 = vmatprep.subr.bf16.mxu0 0
    %798 = vmatpush1.bf16.msra.mxu0 0
    %799 = vmatprep.subr.bf16.mxu0 0
    %800 = vmatpush1.bf16.msra.mxu0 0
    %801 = vmatprep.subr.bf16.mxu0 0
    %802 = vmatpush1.bf16.msra.mxu0 0
    %803 = vmatprep.mubr.bf16.mxu0 0
    %804 = vmatmul.mubr.bf16.gmra.mrb[0].mxu0 %v676
    %v805 = vpop.f32.mrb[0].mxu0
    %v806 = vadd.f32 %v648, %v805
    %v807 = vpop.f32.mrb[0].mxu0
    %v808 = vpop.f32.mrb[0].mxu0
    %v809 = vadd.f32 %v648, %v808
    %v810 = vpop.f32.mrb[0].mxu0
    %811 = vmatprep.mubr.bf16.mxu0 0
    %812 = vmatmul.mubr.bf16.gmra.mrb[0].mxu0 %v679
    %v813 = vpop.f32.mrb[0].mxu0
    %v814 = vadd.f32 %v648, %v813
    %v815 = vpop.f32.mrb[0].mxu0
    %v816 = vpop.f32.mrb[0].mxu0
    %v817 = vadd.f32 %v648, %v816
    %v818 = vpop.f32.mrb[0].mxu0
    %819 = vmatprep.mubr.bf16.mxu0 0
    %820 = vmatmul.mubr.bf16.gmra.mrb[0].mxu0 %v682
    %v821 = vpop.f32.mrb[0].mxu0
    %v822 = vadd.f32 %v648, %v821
    %v823 = vpop.f32.mrb[0].mxu0
    %v824 = vpop.f32.mrb[0].mxu0
    %v825 = vadd.f32 %v648, %v824
    %v826 = vpop.f32.mrb[0].mxu0
    %827 = vmatprep.mubr.bf16.mxu0 0
    %828 = vmatmul.mubr.bf16.gmra.mrb[0].mxu0 %v685
    %v829 = vpop.f32.mrb[0].mxu0
    %v830 = vadd.f32 %v648, %v829
    %v831 = vpop.f32.mrb[0].mxu0
    %v832 = vpop.f32.mrb[0].mxu0
    %v833 = vadd.f32 %v648, %v832
    %v834 = vpop.f32.mrb[0].mxu0
    %835 = vmatprep.mubr.bf16.mxu0 0
    %836 = vmatmul.mubr.bf16.gmra.mrb[0].mxu0 %v688
    %v837 = vpop.f32.mrb[0].mxu0
    %v838 = vadd.f32 %v648, %v837
    %v839 = vpop.f32.mrb[0].mxu0
    %v840 = vpop.f32.mrb[0].mxu0
    %v841 = vadd.f32 %v648, %v840
    %v842 = vpop.f32.mrb[0].mxu0
    %843 = vmatprep.mubr.bf16.mxu0 0
    %844 = vmatmul.mubr.bf16.gmra.mrb[0].mxu0 %v691
    %v845 = vpop.f32.mrb[0].mxu0
    %v846 = vadd.f32 %v648, %v845
    %v847 = vpop.f32.mrb[0].mxu0
    %v848 = vpop.f32.mrb[0].mxu0
    %v849 = vadd.f32 %v648, %v848
    %v850 = vpop.f32.mrb[0].mxu0
    %851 = vmatprep.mubr.bf16.mxu0 0
    %852 = vmatmul.mubr.bf16.gmra.mrb[0].mxu0 %v694
    %v853 = vpop.f32.mrb[0].mxu0
    %v854 = vadd.f32 %v648, %v853
    %v855 = vpop.f32.mrb[0].mxu0
    %v856 = vpop.f32.mrb[0].mxu0
    %v857 = vadd.f32 %v648, %v856
    %v858 = vpop.f32.mrb[0].mxu0
    %859 = vmatprep.mubr.bf16.mxu0 0
    %860 = vmatmul.mubr.bf16.gmra.mrb[0].mxu0 %v697
    %v861 = vpop.f32.mrb[0].mxu0
    %v862 = vadd.f32 %v648, %v861
    %v863 = vpop.f32.mrb[0].mxu0
    %v864 = vpop.f32.mrb[0].mxu0
    %v865 = vadd.f32 %v648, %v864
    %v866 = vpop.f32.mrb[0].mxu0
    %867 = vmatprep.mubr.bf16.mxu0 0
    %868 = vmatmul.mubr.bf16.gmra.mrb[0].mxu0 %v700
    %v869 = vpop.f32.mrb[0].mxu0
    %v870 = vadd.f32 %v648, %v869
    %v871 = vpop.f32.mrb[0].mxu0
    %v872 = vpop.f32.mrb[0].mxu0
    %v873 = vadd.f32 %v648, %v872
    %v874 = vpop.f32.mrb[0].mxu0
    %875 = vmatprep.mubr.bf16.mxu0 0
    %876 = vmatmul.mubr.bf16.gmra.mrb[0].mxu0 %v703
    %v877 = vpop.f32.mrb[0].mxu0
    %v878 = vadd.f32 %v648, %v877
    %v879 = vpop.f32.mrb[0].mxu0
    %v880 = vpop.f32.mrb[0].mxu0
    %v881 = vadd.f32 %v648, %v880
    %v882 = vpop.f32.mrb[0].mxu0
    %883 = vmatprep.mubr.bf16.mxu0 0
    %884 = vmatmul.mubr.bf16.gmra.mrb[0].mxu0 %v706
    %v885 = vpop.f32.mrb[0].mxu0
    %v886 = vadd.f32 %v648, %v885
    %v887 = vpop.f32.mrb[0].mxu0
    %v888 = vpop.f32.mrb[0].mxu0
    %v889 = vadd.f32 %v648, %v888
    %v890 = vpop.f32.mrb[0].mxu0
    %891 = vmatprep.mubr.bf16.mxu0 0
    %892 = vmatmul.mubr.bf16.gmra.mrb[0].mxu0 %v709
    %v893 = vpop.f32.mrb[0].mxu0
    %v894 = vadd.f32 %v648, %v893
    %v895 = vpop.f32.mrb[0].mxu0
    %v896 = vpop.f32.mrb[0].mxu0
    %v897 = vadd.f32 %v648, %v896
    %v898 = vpop.f32.mrb[0].mxu0
    %899 = vmatprep.mubr.bf16.mxu0 0
    %900 = vmatmul.mubr.bf16.gmra.mrb[0].mxu0 %v712
    %v901 = vpop.f32.mrb[0].mxu0
    %v902 = vadd.f32 %v648, %v901
    %v903 = vpop.f32.mrb[0].mxu0
    %v904 = vpop.f32.mrb[0].mxu0
    %v905 = vadd.f32 %v648, %v904
    %v906 = vpop.f32.mrb[0].mxu0
    %907 = vmatprep.mubr.bf16.mxu0 0
    %908 = vmatmul.mubr.bf16.gmra.mrb[0].mxu0 %v715
    %v909 = vpop.f32.mrb[0].mxu0
    %v910 = vadd.f32 %v648, %v909
    %v911 = vpop.f32.mrb[0].mxu0
    %v912 = vpop.f32.mrb[0].mxu0
    %v913 = vadd.f32 %v648, %v912
    %v914 = vpop.f32.mrb[0].mxu0
    %915 = vmatprep.mubr.bf16.mxu0 0
    %916 = vmatmul.mubr.bf16.gmra.mrb[0].mxu0 %v718
    %v917 = vpop.f32.mrb[0].mxu0
    %v918 = vadd.f32 %v648, %v917
    %v919 = vpop.f32.mrb[0].mxu0
    %v920 = vpop.f32.mrb[0].mxu0
    %v921 = vadd.f32 %v648, %v920
    %v922 = vpop.f32.mrb[0].mxu0
    %923 = vmatprep.mubr.bf16.mxu0 0
    %924 = vmatmul.mubr.bf16.gmra.mrb[0].mxu0 %v721
    %v925 = vpop.f32.mrb[0].mxu0
    %v926 = vadd.f32 %v648, %v925
    %v927 = vpop.f32.mrb[0].mxu0
    %v928 = vpop.f32.mrb[0].mxu0
    %v929 = vadd.f32 %v648, %v928
    %v930 = vpop.f32.mrb[0].mxu0
    %931 = vmatprep.mubr.bf16.mxu0 0
    %932 = vmatmul.mubr.bf16.gmra.mrb[0].mxu0 %v724
    %v933 = vpop.f32.mrb[0].mxu0
    %v934 = vadd.f32 %v648, %v933
    %v935 = vpop.f32.mrb[0].mxu0
    %v936 = vpop.f32.mrb[0].mxu0
    %v937 = vadd.f32 %v648, %v936
    %v938 = vpop.f32.mrb[0].mxu0
    %939 = vmatprep.mubr.bf16.mxu0 0
    %940 = vmatmul.mubr.bf16.gmra.mrb[0].mxu0 %v727
    %v941 = vpop.f32.mrb[0].mxu0
    %v942 = vadd.f32 %v648, %v941
    %v943 = vpop.f32.mrb[0].mxu0
    %v944 = vpop.f32.mrb[0].mxu0
    %v945 = vadd.f32 %v648, %v944
    %v946 = vpop.f32.mrb[0].mxu0
    %947 = vmatprep.mubr.bf16.mxu0 0
    %948 = vmatmul.mubr.bf16.gmra.mrb[0].mxu0 %v730
    %v949 = vpop.f32.mrb[0].mxu0
    %v950 = vadd.f32 %v648, %v949
    %v951 = vpop.f32.mrb[0].mxu0
    %v952 = vpop.f32.mrb[0].mxu0
    %v953 = vadd.f32 %v648, %v952
    %v954 = vpop.f32.mrb[0].mxu0
    %955 = vmatprep.mubr.bf16.mxu0 0
    %956 = vmatmul.mubr.bf16.gmra.mrb[0].mxu0 %v733
    %v957 = vpop.f32.mrb[0].mxu0
    %v958 = vadd.f32 %v648, %v957
    %v959 = vpop.f32.mrb[0].mxu0
    %v960 = vpop.f32.mrb[0].mxu0
    %v961 = vadd.f32 %v648, %v960
    %v962 = vpop.f32.mrb[0].mxu0
    %963 = vmatprep.mubr.bf16.mxu0 0
    %964 = vmatmul.mubr.bf16.gmra.mrb[0].mxu0 %v736
    %v965 = vpop.f32.mrb[0].mxu0
    %v966 = vadd.f32 %v648, %v965
    %v967 = vpop.f32.mrb[0].mxu0
    %v968 = vpop.f32.mrb[0].mxu0
    %v969 = vadd.f32 %v648, %v968
    %v970 = vpop.f32.mrb[0].mxu0
    %971 = vmatprep.mubr.bf16.mxu0 0
    %972 = vmatmul.mubr.bf16.gmra.mrb[0].mxu0 %v739
    %v973 = vpop.f32.mrb[0].mxu0
    %v974 = vadd.f32 %v648, %v973
    %v975 = vpop.f32.mrb[0].mxu0
    %v976 = vpop.f32.mrb[0].mxu0
    %v977 = vadd.f32 %v648, %v976
    %v978 = vpop.f32.mrb[0].mxu0
    %979 = vmatprep.mubr.bf16.mxu0 0
    %980 = vmatmul.mubr.bf16.gmra.mrb[0].mxu0 %v742
    %v981 = vpop.f32.mrb[0].mxu0
    %v982 = vadd.f32 %v648, %v981
    %v983 = vpop.f32.mrb[0].mxu0
    %v984 = vpop.f32.mrb[0].mxu0
    %v985 = vadd.f32 %v648, %v984
    %v986 = vpop.f32.mrb[0].mxu0
    %987 = vmatprep.mubr.bf16.mxu0 0
    %988 = vmatmul.mubr.bf16.gmra.mrb[0].mxu0 %v745
    %v989 = vpop.f32.mrb[0].mxu0
    %v990 = vadd.f32 %v648, %v989
    %v991 = vpop.f32.mrb[0].mxu0
    %v992 = vpop.f32.mrb[0].mxu0
    %v993 = vadd.f32 %v648, %v992
    %v994 = vpop.f32.mrb[0].mxu0
    %995 = vmatprep.mubr.bf16.mxu0 0
    %996 = vmatmul.mubr.bf16.gmra.mrb[0].mxu0 %v748
    %v997 = vpop.f32.mrb[0].mxu0
    %v998 = vadd.f32 %v648, %v997
    %v999 = vpop.f32.mrb[0].mxu0
    %v1000 = vpop.f32.mrb[0].mxu0
    %v1001 = vadd.f32 %v648, %v1000
    %v1002 = vpop.f32.mrb[0].mxu0
    %1003 = vmatprep.mubr.bf16.mxu0 0
    %1004 = vmatmul.mubr.bf16.gmra.mrb[0].mxu0 %v751
    %v1005 = vpop.f32.mrb[0].mxu0
    %v1006 = vadd.f32 %v648, %v1005
    %v1007 = vpop.f32.mrb[0].mxu0
    %v1008 = vpop.f32.mrb[0].mxu0
    %v1009 = vadd.f32 %v648, %v1008
    %v1010 = vpop.f32.mrb[0].mxu0
    %1011 = vmatprep.mubr.bf16.mxu0 0
    %1012 = vmatmul.mubr.bf16.gmra.mrb[0].mxu0 %v754
    %v1013 = vpop.f32.mrb[0].mxu0
    %v1014 = vadd.f32 %v648, %v1013
    %v1015 = vpop.f32.mrb[0].mxu0
    %v1016 = vpop.f32.mrb[0].mxu0
    %v1017 = vadd.f32 %v648, %v1016
    %v1018 = vpop.f32.mrb[0].mxu0
    %1019 = vmatprep.mubr.bf16.mxu0 0
    %1020 = vmatmul.mubr.bf16.gmra.mrb[0].mxu0 %v757
    %v1021 = vpop.f32.mrb[0].mxu0
    %v1022 = vadd.f32 %v648, %v1021
    %v1023 = vpop.f32.mrb[0].mxu0
    %v1024 = vpop.f32.mrb[0].mxu0
    %v1025 = vadd.f32 %v648, %v1024
    %v1026 = vpop.f32.mrb[0].mxu0
    %1027 = vmatprep.mubr.bf16.mxu0 0
    %1028 = vmatmul.mubr.bf16.gmra.mrb[0].mxu0 %v760
    %v1029 = vpop.f32.mrb[0].mxu0
    %v1030 = vadd.f32 %v648, %v1029
    %v1031 = vpop.f32.mrb[0].mxu0
    %v1032 = vpop.f32.mrb[0].mxu0
    %v1033 = vadd.f32 %v648, %v1032
    %v1034 = vpop.f32.mrb[0].mxu0
    %1035 = vmatprep.mubr.bf16.mxu0 0
    %1036 = vmatmul.mubr.bf16.gmra.mrb[0].mxu0 %v763
    %v1037 = vpop.f32.mrb[0].mxu0
    %v1038 = vadd.f32 %v648, %v1037
    %v1039 = vpop.f32.mrb[0].mxu0
    %v1040 = vpop.f32.mrb[0].mxu0
    %v1041 = vadd.f32 %v648, %v1040
    %v1042 = vpop.f32.mrb[0].mxu0
    %1043 = vmatprep.mubr.bf16.mxu0 0
    %1044 = vmatmul.mubr.bf16.gmra.mrb[0].mxu0 %v766
    %v1045 = vpop.f32.mrb[0].mxu0
    %v1046 = vadd.f32 %v648, %v1045
    %v1047 = vpop.f32.mrb[0].mxu0
    %v1048 = vpop.f32.mrb[0].mxu0
    %v1049 = vadd.f32 %v648, %v1048
    %v1050 = vpop.f32.mrb[0].mxu0
    %1051 = vmatprep.mubr.bf16.mxu0 0
    %1052 = vmatmul.mubr.bf16.gmra.mrb[0].mxu0 %v769
    %v1053 = vpop.f32.mrb[0].mxu0
    %v1054 = vadd.f32 %v648, %v1053
    %v1055 = vpop.f32.mrb[0].mxu0
    %v1056 = vpop.f32.mrb[0].mxu0
    %v1057 = vadd.f32 %v648, %v1056
    %v1058 = vpop.f32.mrb[0].mxu0
    %1059 = vdwg.mxu0
    %v1060 = vmax.f32 %v806, 0.0
    %v1061 = vmax.f32 %v809, 0.0
    %v1062 = vmax.f32 %v814, 0.0
    %v1063 = vmax.f32 %v817, 0.0
    %v1064 = vmax.f32 %v822, 0.0
    %v1065 = vmax.f32 %v825, 0.0
    %v1066 = vmax.f32 %v830, 0.0
    %v1067 = vmax.f32 %v833, 0.0
    %v1068 = vmax.f32 %v838, 0.0
    %v1069 = vmax.f32 %v841, 0.0
    %v1070 = vmax.f32 %v846, 0.0
    %v1071 = vmax.f32 %v849, 0.0
    %v1072 = vmax.f32 %v854, 0.0
    %v1073 = vmax.f32 %v857, 0.0
    %v1074 = vmax.f32 %v862, 0.0
    %v1075 = vmax.f32 %v865, 0.0
    %v1076 = vmax.f32 %v870, 0.0
    %v1077 = vmax.f32 %v873, 0.0
    %v1078 = vmax.f32 %v878, 0.0
    %v1079 = vmax.f32 %v881, 0.0
    %v1080 = vmax.f32 %v886, 0.0
    %v1081 = vmax.f32 %v889, 0.0
    %v1082 = vmax.f32 %v894, 0.0
    %v1083 = vmax.f32 %v897, 0.0
    %v1084 = vmax.f32 %v902, 0.0
    %v1085 = vmax.f32 %v905, 0.0
    %v1086 = vmax.f32 %v910, 0.0
    %v1087 = vmax.f32 %v913, 0.0
    %v1088 = vmax.f32 %v918, 0.0
    %v1089 = vmax.f32 %v921, 0.0
    %v1090 = vmax.f32 %v926, 0.0
    %v1091 = vmax.f32 %v929, 0.0
    %v1092 = vmax.f32 %v934, 0.0
    %v1093 = vmax.f32 %v937, 0.0
    %v1094 = vmax.f32 %v942, 0.0
    %v1095 = vmax.f32 %v945, 0.0
    %v1096 = vmax.f32 %v950, 0.0
    %v1097 = vmax.f32 %v953, 0.0
    %v1098 = vmax.f32 %v958, 0.0
    %v1099 = vmax.f32 %v961, 0.0
    %v1100 = vmax.f32 %v966, 0.0
    %v1101 = vmax.f32 %v969, 0.0
    %v1102 = vmax.f32 %v974, 0.0
    %v1103 = vmax.f32 %v977, 0.0
    %v1104 = vmax.f32 %v982, 0.0
    %v1105 = vmax.f32 %v985, 0.0
    %v1106 = vmax.f32 %v990, 0.0
    %v1107 = vmax.f32 %v993, 0.0
    %v1108 = vmax.f32 %v998, 0.0
    %v1109 = vmax.f32 %v1001, 0.0
    %v1110 = vmax.f32 %v1006, 0.0
    %v1111 = vmax.f32 %v1009, 0.0
    %v1112 = vmax.f32 %v1014, 0.0
    %v1113 = vmax.f32 %v1017, 0.0
    %v1114 = vmax.f32 %v1022, 0.0
    %v1115 = vmax.f32 %v1025, 0.0
    %v1116 = vmax.f32 %v1030, 0.0
    %v1117 = vmax.f32 %v1033, 0.0
    %v1118 = vmax.f32 %v1038, 0.0
    %v1119 = vmax.f32 %v1041, 0.0
    %v1120 = vmax.f32 %v1046, 0.0
    %v1121 = vmax.f32 %v1049, 0.0
    %v1122 = vmax.f32 %v1054, 0.0
    %v1123 = vmax.f32 %v1057, 0.0
    %v1124 = vpack.c.bf16 %v1061, %v1060
    %v1125 = vpack.c.bf16 %v1063, %v1062
    %v1126 = vpack.c.bf16 %v1065, %v1064
    %v1127 = vpack.c.bf16 %v1067, %v1066
    %v1128 = vpack.c.bf16 %v1069, %v1068
    %v1129 = vpack.c.bf16 %v1071, %v1070
    %v1130 = vpack.c.bf16 %v1073, %v1072
    %v1131 = vpack.c.bf16 %v1075, %v1074
    %v1132 = vpack.c.bf16 %v1077, %v1076
    %v1133 = vpack.c.bf16 %v1079, %v1078
    %v1134 = vpack.c.bf16 %v1081, %v1080
    %v1135 = vpack.c.bf16 %v1083, %v1082
    %v1136 = vpack.c.bf16 %v1085, %v1084
    %v1137 = vpack.c.bf16 %v1087, %v1086
    %v1138 = vpack.c.bf16 %v1089, %v1088
    %v1139 = vpack.c.bf16 %v1091, %v1090
    %v1140 = vpack.c.bf16 %v1093, %v1092
    %v1141 = vpack.c.bf16 %v1095, %v1094
    %v1142 = vpack.c.bf16 %v1097, %v1096
    %v1143 = vpack.c.bf16 %v1099, %v1098
    %v1144 = vpack.c.bf16 %v1101, %v1100
    %v1145 = vpack.c.bf16 %v1103, %v1102
    %v1146 = vpack.c.bf16 %v1105, %v1104
    %v1147 = vpack.c.bf16 %v1107, %v1106
    %v1148 = vpack.c.bf16 %v1109, %v1108
    %v1149 = vpack.c.bf16 %v1111, %v1110
    %v1150 = vpack.c.bf16 %v1113, %v1112
    %v1151 = vpack.c.bf16 %v1115, %v1114
    %v1152 = vpack.c.bf16 %v1117, %v1116
    %v1153 = vpack.c.bf16 %v1119, %v1118
    %v1154 = vpack.c.bf16 %v1121, %v1120
    %v1155 = vpack.c.bf16 %v1123, %v1122
    %v1156 = vld [vmem:[%s5] sm:$0xf]
    %v1157 = vld [vmem:[%s5 + $0x4] sm:$0xf]
    %v1158 = vld [vmem:[%s5 + $0x8] sm:$0xf]
    %v1159 = vld [vmem:[%s5 + $0xc] sm:$0xf]
    %v1160 = vld [vmem:[%s5 + $0x10] sm:$0xf]
    %v1161 = vld [vmem:[%s5 + $0x14] sm:$0xf]
    %v1162 = vld [vmem:[%s5 + $0x18] sm:$0xf]
    %v1163 = vld [vmem:[%s5 + $0x1c] sm:$0xf]
    %v1164 = vld [vmem:[%s6] sm:$0x1]
    %v1166 = vlaneseq
    %v1167 = vshrl.u32 %v1166, 7
    %v1168 = vsub.s32 0, %v1167
    %v1169 = vrot.slane %v1164, %v1168
    %v1179 = vunpack.c.l.b16 %v1156
    %v1180 = vunpack.c.l.b16 %v1157
    %v1181 = vunpack.c.l.b16 %v1158
    %v1182 = vunpack.c.l.b16 %v1159
    %v1183 = vunpack.c.l.b16 %v1160
    %v1184 = vunpack.c.l.b16 %v1161
    %v1185 = vunpack.c.l.b16 %v1162
    %v1186 = vunpack.c.l.b16 %v1163
    %v1187 = vpack.c.b16 %v1180, %v1179
    %v1188 = vpack.c.b16 %v1182, %v1181
    %v1189 = vpack.c.b16 %v1184, %v1183
    %v1190 = vpack.c.b16 %v1186, %v1185
    %v1196 = vsel %vm674, %v1124, 0
    %v1199 = vsel %vm674, %v1125, 0
    %v1202 = vsel %vm674, %v1126, 0
    %v1205 = vsel %vm674, %v1127, 0
    %v1208 = vsel %vm674, %v1128, 0
    %v1211 = vsel %vm674, %v1129, 0
    %v1214 = vsel %vm674, %v1130, 0
    %v1217 = vsel %vm674, %v1131, 0
    %v1220 = vsel %vm674, %v1132, 0
    %v1223 = vsel %vm674, %v1133, 0
    %v1226 = vsel %vm674, %v1134, 0
    %v1229 = vsel %vm674, %v1135, 0
    %v1232 = vsel %vm674, %v1136, 0
    %v1235 = vsel %vm674, %v1137, 0
    %v1238 = vsel %vm674, %v1138, 0
    %v1241 = vsel %vm674, %v1139, 0
    %v1244 = vsel %vm674, %v1140, 0
    %v1247 = vsel %vm674, %v1141, 0
    %v1250 = vsel %vm674, %v1142, 0
    %v1253 = vsel %vm674, %v1143, 0
    %v1256 = vsel %vm674, %v1144, 0
    %v1259 = vsel %vm674, %v1145, 0
    %v1262 = vsel %vm674, %v1146, 0
    %v1265 = vsel %vm674, %v1147, 0
    %v1268 = vsel %vm674, %v1148, 0
    %v1271 = vsel %vm674, %v1149, 0
    %v1274 = vsel %vm674, %v1150, 0
    %v1277 = vsel %vm674, %v1151, 0
    %v1280 = vsel %vm674, %v1152, 0
    %v1283 = vsel %vm674, %v1153, 0
    %v1286 = vsel %vm674, %v1154, 0
    %v1289 = vsel %vm674, %v1155, 0
    %1291 = vmatprep.subr.bf16.mxu0 0
    %1292 = vmatpush1.bf16.msra.mxu0 %v1187
    %1293 = vmatprep.subr.bf16.mxu0 0
    %1294 = vmatpush1.bf16.msra.mxu0 %v1188
    %1295 = vmatprep.subr.bf16.mxu0 0
    %1296 = vmatpush1.bf16.msra.mxu0 %v1189
    %1297 = vmatprep.subr.bf16.mxu0 0
    %1298 = vmatpush1.bf16.msra.mxu0 %v1190
    %1299 = vmatprep.subr.bf16.mxu0 0
    %1300 = vmatpush1.bf16.msra.mxu0 0
    %1301 = vmatprep.subr.bf16.mxu0 0
    %1302 = vmatpush1.bf16.msra.mxu0 0
    %1303 = vmatprep.subr.bf16.mxu0 0
    %1304 = vmatpush1.bf16.msra.mxu0 0
    %1305 = vmatprep.subr.bf16.mxu0 0
    %1306 = vmatpush1.bf16.msra.mxu0 0
    %1307 = vmatprep.subr.bf16.mxu0 0
    %1308 = vmatpush1.bf16.msra.mxu0 0
    %1309 = vmatprep.subr.bf16.mxu0 0
    %1310 = vmatpush1.bf16.msra.mxu0 0
    %1311 = vmatprep.subr.bf16.mxu0 0
    %1312 = vmatpush1.bf16.msra.mxu0 0
    %1313 = vmatprep.subr.bf16.mxu0 0
    %1314 = vmatpush1.bf16.msra.mxu0 0
    %1315 = vmatprep.subr.bf16.mxu0 0
    %1316 = vmatpush1.bf16.msra.mxu0 0
    %1317 = vmatprep.subr.bf16.mxu0 0
    %1318 = vmatpush1.bf16.msra.mxu0 0
    %1319 = vmatprep.subr.bf16.mxu0 0
    %1320 = vmatpush1.bf16.msra.mxu0 0
    %1321 = vmatprep.subr.bf16.mxu0 0
    %1322 = vmatpush1.bf16.msra.mxu0 0
    %1323 = vmatprep.mubr.bf16.mxu0 0
    %1324 = vmatmul.mubr.bf16.gmra.mrb[0].mxu0 %v1196
    %v1325 = vpop.f32.mrb[0].mxu0
    %v1326 = vadd.f32 %v1169, %v1325
    %v1327 = vpop.f32.mrb[0].mxu0
    %v1328 = vpop.f32.mrb[0].mxu0
    %v1329 = vadd.f32 %v1169, %v1328
    %v1330 = vpop.f32.mrb[0].mxu0
    %1331 = vmatprep.mubr.bf16.mxu0 0
    %1332 = vmatmul.mubr.bf16.gmra.mrb[0].mxu0 %v1199
    %v1333 = vpop.f32.mrb[0].mxu0
    %v1334 = vadd.f32 %v1169, %v1333
    %v1335 = vpop.f32.mrb[0].mxu0
    %v1336 = vpop.f32.mrb[0].mxu0
    %v1337 = vadd.f32 %v1169, %v1336
    %v1338 = vpop.f32.mrb[0].mxu0
    %1339 = vmatprep.mubr.bf16.mxu0 0
    %1340 = vmatmul.mubr.bf16.gmra.mrb[0].mxu0 %v1202
    %v1341 = vpop.f32.mrb[0].mxu0
    %v1342 = vadd.f32 %v1169, %v1341
    %v1343 = vpop.f32.mrb[0].mxu0
    %v1344 = vpop.f32.mrb[0].mxu0
    %v1345 = vadd.f32 %v1169, %v1344
    %v1346 = vpop.f32.mrb[0].mxu0
    %1347 = vmatprep.mubr.bf16.mxu0 0
    %1348 = vmatmul.mubr.bf16.gmra.mrb[0].mxu0 %v1205
    %v1349 = vpop.f32.mrb[0].mxu0
    %v1350 = vadd.f32 %v1169, %v1349
    %v1351 = vpop.f32.mrb[0].mxu0
    %v1352 = vpop.f32.mrb[0].mxu0
    %v1353 = vadd.f32 %v1169, %v1352
    %v1354 = vpop.f32.mrb[0].mxu0
    %1355 = vmatprep.mubr.bf16.mxu0 0
    %1356 = vmatmul.mubr.bf16.gmra.mrb[0].mxu0 %v1208
    %v1357 = vpop.f32.mrb[0].mxu0
    %v1358 = vadd.f32 %v1169, %v1357
    %v1359 = vpop.f32.mrb[0].mxu0
    %v1360 = vpop.f32.mrb[0].mxu0
    %v1361 = vadd.f32 %v1169, %v1360
    %v1362 = vpop.f32.mrb[0].mxu0
    %1363 = vmatprep.mubr.bf16.mxu0 0
    %1364 = vmatmul.mubr.bf16.gmra.mrb[0].mxu0 %v1211
    %v1365 = vpop.f32.mrb[0].mxu0
    %v1366 = vadd.f32 %v1169, %v1365
    %v1367 = vpop.f32.mrb[0].mxu0
    %v1368 = vpop.f32.mrb[0].mxu0
    %v1369 = vadd.f32 %v1169, %v1368
    %v1370 = vpop.f32.mrb[0].mxu0
    %1371 = vmatprep.mubr.bf16.mxu0 0
    %1372 = vmatmul.mubr.bf16.gmra.mrb[0].mxu0 %v1214
    %v1373 = vpop.f32.mrb[0].mxu0
    %v1374 = vadd.f32 %v1169, %v1373
    %v1375 = vpop.f32.mrb[0].mxu0
    %v1376 = vpop.f32.mrb[0].mxu0
    %v1377 = vadd.f32 %v1169, %v1376
    %v1378 = vpop.f32.mrb[0].mxu0
    %1379 = vmatprep.mubr.bf16.mxu0 0
    %1380 = vmatmul.mubr.bf16.gmra.mrb[0].mxu0 %v1217
    %v1381 = vpop.f32.mrb[0].mxu0
    %v1382 = vadd.f32 %v1169, %v1381
    %v1383 = vpop.f32.mrb[0].mxu0
    %v1384 = vpop.f32.mrb[0].mxu0
    %v1385 = vadd.f32 %v1169, %v1384
    %v1386 = vpop.f32.mrb[0].mxu0
    %1387 = vmatprep.mubr.bf16.mxu0 0
    %1388 = vmatmul.mubr.bf16.gmra.mrb[0].mxu0 %v1220
    %v1389 = vpop.f32.mrb[0].mxu0
    %v1390 = vadd.f32 %v1169, %v1389
    %v1391 = vpop.f32.mrb[0].mxu0
    %v1392 = vpop.f32.mrb[0].mxu0
    %v1393 = vadd.f32 %v1169, %v1392
    %v1394 = vpop.f32.mrb[0].mxu0
    %1395 = vmatprep.mubr.bf16.mxu0 0
    %1396 = vmatmul.mubr.bf16.gmra.mrb[0].mxu0 %v1223
    %v1397 = vpop.f32.mrb[0].mxu0
    %v1398 = vadd.f32 %v1169, %v1397
    %v1399 = vpop.f32.mrb[0].mxu0
    %v1400 = vpop.f32.mrb[0].mxu0
    %v1401 = vadd.f32 %v1169, %v1400
    %v1402 = vpop.f32.mrb[0].mxu0
    %1403 = vmatprep.mubr.bf16.mxu0 0
    %1404 = vmatmul.mubr.bf16.gmra.mrb[0].mxu0 %v1226
    %v1405 = vpop.f32.mrb[0].mxu0
    %v1406 = vadd.f32 %v1169, %v1405
    %v1407 = vpop.f32.mrb[0].mxu0
    %v1408 = vpop.f32.mrb[0].mxu0
    %v1409 = vadd.f32 %v1169, %v1408
    %v1410 = vpop.f32.mrb[0].mxu0
    %1411 = vmatprep.mubr.bf16.mxu0 0
    %1412 = vmatmul.mubr.bf16.gmra.mrb[0].mxu0 %v1229
    %v1413 = vpop.f32.mrb[0].mxu0
    %v1414 = vadd.f32 %v1169, %v1413
    %v1415 = vpop.f32.mrb[0].mxu0
    %v1416 = vpop.f32.mrb[0].mxu0
    %v1417 = vadd.f32 %v1169, %v1416
    %v1418 = vpop.f32.mrb[0].mxu0
    %1419 = vmatprep.mubr.bf16.mxu0 0
    %1420 = vmatmul.mubr.bf16.gmra.mrb[0].mxu0 %v1232
    %v1421 = vpop.f32.mrb[0].mxu0
    %v1422 = vadd.f32 %v1169, %v1421
    %v1423 = vpop.f32.mrb[0].mxu0
    %v1424 = vpop.f32.mrb[0].mxu0
    %v1425 = vadd.f32 %v1169, %v1424
    %v1426 = vpop.f32.mrb[0].mxu0
    %1427 = vmatprep.mubr.bf16.mxu0 0
    %1428 = vmatmul.mubr.bf16.gmra.mrb[0].mxu0 %v1235
    %v1429 = vpop.f32.mrb[0].mxu0
    %v1430 = vadd.f32 %v1169, %v1429
    %v1431 = vpop.f32.mrb[0].mxu0
    %v1432 = vpop.f32.mrb[0].mxu0
    %v1433 = vadd.f32 %v1169, %v1432
    %v1434 = vpop.f32.mrb[0].mxu0
    %1435 = vmatprep.mubr.bf16.mxu0 0
    %1436 = vmatmul.mubr.bf16.gmra.mrb[0].mxu0 %v1238
    %v1437 = vpop.f32.mrb[0].mxu0
    %v1438 = vadd.f32 %v1169, %v1437
    %v1439 = vpop.f32.mrb[0].mxu0
    %v1440 = vpop.f32.mrb[0].mxu0
    %v1441 = vadd.f32 %v1169, %v1440
    %v1442 = vpop.f32.mrb[0].mxu0
    %1443 = vmatprep.mubr.bf16.mxu0 0
    %1444 = vmatmul.mubr.bf16.gmra.mrb[0].mxu0 %v1241
    %v1445 = vpop.f32.mrb[0].mxu0
    %v1446 = vadd.f32 %v1169, %v1445
    %v1447 = vpop.f32.mrb[0].mxu0
    %v1448 = vpop.f32.mrb[0].mxu0
    %v1449 = vadd.f32 %v1169, %v1448
    %v1450 = vpop.f32.mrb[0].mxu0
    %1451 = vmatprep.mubr.bf16.mxu0 0
    %1452 = vmatmul.mubr.bf16.gmra.mrb[0].mxu0 %v1244
    %v1453 = vpop.f32.mrb[0].mxu0
    %v1454 = vadd.f32 %v1169, %v1453
    %v1455 = vpop.f32.mrb[0].mxu0
    %v1456 = vpop.f32.mrb[0].mxu0
    %v1457 = vadd.f32 %v1169, %v1456
    %v1458 = vpop.f32.mrb[0].mxu0
    %1459 = vmatprep.mubr.bf16.mxu0 0
    %1460 = vmatmul.mubr.bf16.gmra.mrb[0].mxu0 %v1247
    %v1461 = vpop.f32.mrb[0].mxu0
    %v1462 = vadd.f32 %v1169, %v1461
    %v1463 = vpop.f32.mrb[0].mxu0
    %v1464 = vpop.f32.mrb[0].mxu0
    %v1465 = vadd.f32 %v1169, %v1464
    %v1466 = vpop.f32.mrb[0].mxu0
    %1467 = vmatprep.mubr.bf16.mxu0 0
    %1468 = vmatmul.mubr.bf16.gmra.mrb[0].mxu0 %v1250
    %v1469 = vpop.f32.mrb[0].mxu0
    %v1470 = vadd.f32 %v1169, %v1469
    %v1471 = vpop.f32.mrb[0].mxu0
    %v1472 = vpop.f32.mrb[0].mxu0
    %v1473 = vadd.f32 %v1169, %v1472
    %v1474 = vpop.f32.mrb[0].mxu0
    %1475 = vmatprep.mubr.bf16.mxu0 0
    %1476 = vmatmul.mubr.bf16.gmra.mrb[0].mxu0 %v1253
    %v1477 = vpop.f32.mrb[0].mxu0
    %v1478 = vadd.f32 %v1169, %v1477
    %v1479 = vpop.f32.mrb[0].mxu0
    %v1480 = vpop.f32.mrb[0].mxu0
    %v1481 = vadd.f32 %v1169, %v1480
    %v1482 = vpop.f32.mrb[0].mxu0
    %1483 = vmatprep.mubr.bf16.mxu0 0
    %1484 = vmatmul.mubr.bf16.gmra.mrb[0].mxu0 %v1256
    %v1485 = vpop.f32.mrb[0].mxu0
    %v1486 = vadd.f32 %v1169, %v1485
    %v1487 = vpop.f32.mrb[0].mxu0
    %v1488 = vpop.f32.mrb[0].mxu0
    %v1489 = vadd.f32 %v1169, %v1488
    %v1490 = vpop.f32.mrb[0].mxu0
    %1491 = vmatprep.mubr.bf16.mxu0 0
    %1492 = vmatmul.mubr.bf16.gmra.mrb[0].mxu0 %v1259
    %v1493 = vpop.f32.mrb[0].mxu0
    %v1494 = vadd.f32 %v1169, %v1493
    %v1495 = vpop.f32.mrb[0].mxu0
    %v1496 = vpop.f32.mrb[0].mxu0
    %v1497 = vadd.f32 %v1169, %v1496
    %v1498 = vpop.f32.mrb[0].mxu0
    %1499 = vmatprep.mubr.bf16.mxu0 0
    %1500 = vmatmul.mubr.bf16.gmra.mrb[0].mxu0 %v1262
    %v1501 = vpop.f32.mrb[0].mxu0
    %v1502 = vadd.f32 %v1169, %v1501
    %v1503 = vpop.f32.mrb[0].mxu0
    %v1504 = vpop.f32.mrb[0].mxu0
    %v1505 = vadd.f32 %v1169, %v1504
    %v1506 = vpop.f32.mrb[0].mxu0
    %1507 = vmatprep.mubr.bf16.mxu0 0
    %1508 = vmatmul.mubr.bf16.gmra.mrb[0].mxu0 %v1265
    %v1509 = vpop.f32.mrb[0].mxu0
    %v1510 = vadd.f32 %v1169, %v1509
    %v1511 = vpop.f32.mrb[0].mxu0
    %v1512 = vpop.f32.mrb[0].mxu0
    %v1513 = vadd.f32 %v1169, %v1512
    %v1514 = vpop.f32.mrb[0].mxu0
    %1515 = vmatprep.mubr.bf16.mxu0 0
    %1516 = vmatmul.mubr.bf16.gmra.mrb[0].mxu0 %v1268
    %v1517 = vpop.f32.mrb[0].mxu0
    %v1518 = vadd.f32 %v1169, %v1517
    %v1519 = vpop.f32.mrb[0].mxu0
    %v1520 = vpop.f32.mrb[0].mxu0
    %v1521 = vadd.f32 %v1169, %v1520
    %v1522 = vpop.f32.mrb[0].mxu0
    %1523 = vmatprep.mubr.bf16.mxu0 0
    %1524 = vmatmul.mubr.bf16.gmra.mrb[0].mxu0 %v1271
    %v1525 = vpop.f32.mrb[0].mxu0
    %v1526 = vadd.f32 %v1169, %v1525
    %v1527 = vpop.f32.mrb[0].mxu0
    %v1528 = vpop.f32.mrb[0].mxu0
    %v1529 = vadd.f32 %v1169, %v1528
    %v1530 = vpop.f32.mrb[0].mxu0
    %1531 = vmatprep.mubr.bf16.mxu0 0
    %1532 = vmatmul.mubr.bf16.gmra.mrb[0].mxu0 %v1274
    %v1533 = vpop.f32.mrb[0].mxu0
    %v1534 = vadd.f32 %v1169, %v1533
    %v1535 = vpop.f32.mrb[0].mxu0
    %v1536 = vpop.f32.mrb[0].mxu0
    %v1537 = vadd.f32 %v1169, %v1536
    %v1538 = vpop.f32.mrb[0].mxu0
    %1539 = vmatprep.mubr.bf16.mxu0 0
    %1540 = vmatmul.mubr.bf16.gmra.mrb[0].mxu0 %v1277
    %v1541 = vpop.f32.mrb[0].mxu0
    %v1542 = vadd.f32 %v1169, %v1541
    %v1543 = vpop.f32.mrb[0].mxu0
    %v1544 = vpop.f32.mrb[0].mxu0
    %v1545 = vadd.f32 %v1169, %v1544
    %v1546 = vpop.f32.mrb[0].mxu0
    %1547 = vmatprep.mubr.bf16.mxu0 0
    %1548 = vmatmul.mubr.bf16.gmra.mrb[0].mxu0 %v1280
    %v1549 = vpop.f32.mrb[0].mxu0
    %v1550 = vadd.f32 %v1169, %v1549
    %v1551 = vpop.f32.mrb[0].mxu0
    %v1552 = vpop.f32.mrb[0].mxu0
    %v1553 = vadd.f32 %v1169, %v1552
    %v1554 = vpop.f32.mrb[0].mxu0
    %1555 = vmatprep.mubr.bf16.mxu0 0
    %1556 = vmatmul.mubr.bf16.gmra.mrb[0].mxu0 %v1283
    %v1557 = vpop.f32.mrb[0].mxu0
    %v1558 = vadd.f32 %v1169, %v1557
    %v1559 = vpop.f32.mrb[0].mxu0
    %v1560 = vpop.f32.mrb[0].mxu0
    %v1561 = vadd.f32 %v1169, %v1560
    %v1562 = vpop.f32.mrb[0].mxu0
    %1563 = vmatprep.mubr.bf16.mxu0 0
    %1564 = vmatmul.mubr.bf16.gmra.mrb[0].mxu0 %v1286
    %v1565 = vpop.f32.mrb[0].mxu0
    %v1566 = vadd.f32 %v1169, %v1565
    %v1567 = vpop.f32.mrb[0].mxu0
    %v1568 = vpop.f32.mrb[0].mxu0
    %v1569 = vadd.f32 %v1169, %v1568
    %v1570 = vpop.f32.mrb[0].mxu0
    %1571 = vmatprep.mubr.bf16.mxu0 0
    %1572 = vmatmul.mubr.bf16.gmra.mrb[0].mxu0 %v1289
    %v1573 = vpop.f32.mrb[0].mxu0
    %v1574 = vadd.f32 %v1169, %v1573
    %v1575 = vpop.f32.mrb[0].mxu0
    %v1576 = vpop.f32.mrb[0].mxu0
    %v1577 = vadd.f32 %v1169, %v1576
    %v1578 = vpop.f32.mrb[0].mxu0
    %1579 = vdwg.mxu0
    %v1580 = vmax.f32 %v1326, 0.0
    %v1581 = vmax.f32 %v1329, 0.0
    %v1582 = vmax.f32 %v1334, 0.0
    %v1583 = vmax.f32 %v1337, 0.0
    %v1584 = vmax.f32 %v1342, 0.0
    %v1585 = vmax.f32 %v1345, 0.0
    %v1586 = vmax.f32 %v1350, 0.0
    %v1587 = vmax.f32 %v1353, 0.0
    %v1588 = vmax.f32 %v1358, 0.0
    %v1589 = vmax.f32 %v1361, 0.0
    %v1590 = vmax.f32 %v1366, 0.0
    %v1591 = vmax.f32 %v1369, 0.0
    %v1592 = vmax.f32 %v1374, 0.0
    %v1593 = vmax.f32 %v1377, 0.0
    %v1594 = vmax.f32 %v1382, 0.0
    %v1595 = vmax.f32 %v1385, 0.0
    %v1596 = vmax.f32 %v1390, 0.0
    %v1597 = vmax.f32 %v1393, 0.0
    %v1598 = vmax.f32 %v1398, 0.0
    %v1599 = vmax.f32 %v1401, 0.0
    %v1600 = vmax.f32 %v1406, 0.0
    %v1601 = vmax.f32 %v1409, 0.0
    %v1602 = vmax.f32 %v1414, 0.0
    %v1603 = vmax.f32 %v1417, 0.0
    %v1604 = vmax.f32 %v1422, 0.0
    %v1605 = vmax.f32 %v1425, 0.0
    %v1606 = vmax.f32 %v1430, 0.0
    %v1607 = vmax.f32 %v1433, 0.0
    %v1608 = vmax.f32 %v1438, 0.0
    %v1609 = vmax.f32 %v1441, 0.0
    %v1610 = vmax.f32 %v1446, 0.0
    %v1611 = vmax.f32 %v1449, 0.0
    %v1612 = vmax.f32 %v1454, 0.0
    %v1613 = vmax.f32 %v1457, 0.0
    %v1614 = vmax.f32 %v1462, 0.0
    %v1615 = vmax.f32 %v1465, 0.0
    %v1616 = vmax.f32 %v1470, 0.0
    %v1617 = vmax.f32 %v1473, 0.0
    %v1618 = vmax.f32 %v1478, 0.0
    %v1619 = vmax.f32 %v1481, 0.0
    %v1620 = vmax.f32 %v1486, 0.0
    %v1621 = vmax.f32 %v1489, 0.0
    %v1622 = vmax.f32 %v1494, 0.0
    %v1623 = vmax.f32 %v1497, 0.0
    %v1624 = vmax.f32 %v1502, 0.0
    %v1625 = vmax.f32 %v1505, 0.0
    %v1626 = vmax.f32 %v1510, 0.0
    %v1627 = vmax.f32 %v1513, 0.0
    %v1628 = vmax.f32 %v1518, 0.0
    %v1629 = vmax.f32 %v1521, 0.0
    %v1630 = vmax.f32 %v1526, 0.0
    %v1631 = vmax.f32 %v1529, 0.0
    %v1632 = vmax.f32 %v1534, 0.0
    %v1633 = vmax.f32 %v1537, 0.0
    %v1634 = vmax.f32 %v1542, 0.0
    %v1635 = vmax.f32 %v1545, 0.0
    %v1636 = vmax.f32 %v1550, 0.0
    %v1637 = vmax.f32 %v1553, 0.0
    %v1638 = vmax.f32 %v1558, 0.0
    %v1639 = vmax.f32 %v1561, 0.0
    %v1640 = vmax.f32 %v1566, 0.0
    %v1641 = vmax.f32 %v1569, 0.0
    %v1642 = vmax.f32 %v1574, 0.0
    %v1643 = vmax.f32 %v1577, 0.0
    %v1644 = vld [vmem:[%s7] sm:$0xf]
    %v1645 = vpack.c.bf16 %v1581, %v1580
    %v1646 = vpack.c.bf16 %v1583, %v1582
    %v1647 = vpack.c.bf16 %v1585, %v1584
    %v1648 = vpack.c.bf16 %v1587, %v1586
    %v1649 = vpack.c.bf16 %v1589, %v1588
    %v1650 = vpack.c.bf16 %v1591, %v1590
    %v1651 = vpack.c.bf16 %v1593, %v1592
    %v1652 = vpack.c.bf16 %v1595, %v1594
    %v1653 = vpack.c.bf16 %v1597, %v1596
    %v1654 = vpack.c.bf16 %v1599, %v1598
    %v1655 = vpack.c.bf16 %v1601, %v1600
    %v1656 = vpack.c.bf16 %v1603, %v1602
    %v1657 = vpack.c.bf16 %v1605, %v1604
    %v1658 = vpack.c.bf16 %v1607, %v1606
    %v1659 = vpack.c.bf16 %v1609, %v1608
    %v1660 = vpack.c.bf16 %v1611, %v1610
    %v1661 = vpack.c.bf16 %v1613, %v1612
    %v1662 = vpack.c.bf16 %v1615, %v1614
    %v1663 = vpack.c.bf16 %v1617, %v1616
    %v1664 = vpack.c.bf16 %v1619, %v1618
    %v1665 = vpack.c.bf16 %v1621, %v1620
    %v1666 = vpack.c.bf16 %v1623, %v1622
    %v1667 = vpack.c.bf16 %v1625, %v1624
    %v1668 = vpack.c.bf16 %v1627, %v1626
    %v1669 = vpack.c.bf16 %v1629, %v1628
    %v1670 = vpack.c.bf16 %v1631, %v1630
    %v1671 = vpack.c.bf16 %v1633, %v1632
    %v1672 = vpack.c.bf16 %v1635, %v1634
    %v1673 = vpack.c.bf16 %v1637, %v1636
    %v1674 = vpack.c.bf16 %v1639, %v1638
    %v1675 = vpack.c.bf16 %v1641, %v1640
    %v1676 = vpack.c.bf16 %v1643, %v1642
    %v1677 = vld [vmem:[%s8] sm:$0xff]
    %1679 = vset.pattern.permute.xlu0 0
    %1680 = vperm.xlu0 %1679, %v1677
    %v1681 = vpop.permute.xlu0 %1680
    %v1684 = vsel %vm153, %v1644, 0
    %v1687 = vsel %vm153, %v1645, 0
    %v1690 = vsel %vm153, %v1646, 0
    %v1693 = vsel %vm153, %v1647, 0
    %v1696 = vsel %vm153, %v1648, 0
    %v1699 = vsel %vm153, %v1649, 0
    %v1702 = vsel %vm153, %v1650, 0
    %v1705 = vsel %vm153, %v1651, 0
    %v1708 = vsel %vm153, %v1652, 0
    %v1711 = vsel %vm153, %v1653, 0
    %v1714 = vsel %vm153, %v1654, 0
    %v1717 = vsel %vm153, %v1655, 0
    %v1720 = vsel %vm153, %v1656, 0
    %v1723 = vsel %vm153, %v1657, 0
    %v1726 = vsel %vm153, %v1658, 0
    %v1729 = vsel %vm153, %v1659, 0
    %v1732 = vsel %vm153, %v1660, 0
    %v1735 = vsel %vm153, %v1661, 0
    %v1738 = vsel %vm153, %v1662, 0
    %v1741 = vsel %vm153, %v1663, 0
    %v1744 = vsel %vm153, %v1664, 0
    %v1747 = vsel %vm153, %v1665, 0
    %v1750 = vsel %vm153, %v1666, 0
    %v1753 = vsel %vm153, %v1667, 0
    %v1756 = vsel %vm153, %v1668, 0
    %v1759 = vsel %vm153, %v1669, 0
    %v1762 = vsel %vm153, %v1670, 0
    %v1765 = vsel %vm153, %v1671, 0
    %v1768 = vsel %vm153, %v1672, 0
    %v1771 = vsel %vm153, %v1673, 0
    %v1774 = vsel %vm153, %v1674, 0
    %v1777 = vsel %vm153, %v1675, 0
    %v1780 = vsel %vm153, %v1676, 0
    %1782 = vmatprep.subr.bf16.mxu0 0
    %1783 = vmatpush1.bf16.xpose.msra.mxu0 %v1687
    %1784 = vmatprep.subr.bf16.mxu0 0
    %1785 = vmatpush1.bf16.xpose.msra.mxu0 %v1690
    %1786 = vmatprep.subr.bf16.mxu0 0
    %1787 = vmatpush1.bf16.xpose.msra.mxu0 %v1693
    %1788 = vmatprep.subr.bf16.mxu0 0
    %1789 = vmatpush1.bf16.xpose.msra.mxu0 %v1696
    %1790 = vmatprep.subr.bf16.mxu0 0
    %1791 = vmatpush1.bf16.xpose.msra.mxu0 %v1699
    %1792 = vmatprep.subr.bf16.mxu0 0
    %1793 = vmatpush1.bf16.xpose.msra.mxu0 %v1702
    %1794 = vmatprep.subr.bf16.mxu0 0
    %1795 = vmatpush1.bf16.xpose.msra.mxu0 %v1705
    %1796 = vmatprep.subr.bf16.mxu0 0
    %1797 = vmatpush1.bf16.xpose.msra.mxu0 %v1708
    %1798 = vmatprep.subr.bf16.mxu0 0
    %1799 = vmatpush1.bf16.xpose.msra.mxu0 %v1711
    %1800 = vmatprep.subr.bf16.mxu0 0
    %1801 = vmatpush1.bf16.xpose.msra.mxu0 %v1714
    %1802 = vmatprep.subr.bf16.mxu0 0
    %1803 = vmatpush1.bf16.xpose.msra.mxu0 %v1717
    %1804 = vmatprep.subr.bf16.mxu0 0
    %1805 = vmatpush1.bf16.xpose.msra.mxu0 %v1720
    %1806 = vmatprep.subr.bf16.mxu0 0
    %1807 = vmatpush1.bf16.xpose.msra.mxu0 %v1723
    %1808 = vmatprep.subr.bf16.mxu0 0
    %1809 = vmatpush1.bf16.xpose.msra.mxu0 %v1726
    %1810 = vmatprep.subr.bf16.mxu0 0
    %1811 = vmatpush1.bf16.xpose.msra.mxu0 %v1729
    %1812 = vmatprep.subr.bf16.mxu0 0
    %1813 = vmatpush1.bf16.xpose.msra.mxu0 %v1732
    %1814 = vmatprep.mubr.bf16.mxu0 0
    %1815 = vmatmul.mubr.bf16.gmra.mrb[0].mxu0 %v1684
    %v1816 = vpop.f32.mrb[0].mxu0
    %v1817 = vadd.f32 %v1681, %v1816
    %v1818 = vpop.f32.mrb[0].mxu0
    %v1819 = vadd.f32 %v1681, %v1818
    %v1820 = vpop.f32.mrb[0].mxu0
    %v1821 = vpop.f32.mrb[0].mxu0
    %1822 = vdwg.mxu0
    %1823 = vmatprep.subr.bf16.mxu0 0
    %1824 = vmatpush1.bf16.xpose.msra.mxu0 %v1735
    %1825 = vmatprep.subr.bf16.mxu0 0
    %1826 = vmatpush1.bf16.xpose.msra.mxu0 %v1738
    %1827 = vmatprep.subr.bf16.mxu0 0
    %1828 = vmatpush1.bf16.xpose.msra.mxu0 %v1741
    %1829 = vmatprep.subr.bf16.mxu0 0
    %1830 = vmatpush1.bf16.xpose.msra.mxu0 %v1744
    %1831 = vmatprep.subr.bf16.mxu0 0
    %1832 = vmatpush1.bf16.xpose.msra.mxu0 %v1747
    %1833 = vmatprep.subr.bf16.mxu0 0
    %1834 = vmatpush1.bf16.xpose.msra.mxu0 %v1750
    %1835 = vmatprep.subr.bf16.mxu0 0
    %1836 = vmatpush1.bf16.xpose.msra.mxu0 %v1753
    %1837 = vmatprep.subr.bf16.mxu0 0
    %1838 = vmatpush1.bf16.xpose.msra.mxu0 %v1756
    %1839 = vmatprep.subr.bf16.mxu0 0
    %1840 = vmatpush1.bf16.xpose.msra.mxu0 %v1759
    %1841 = vmatprep.subr.bf16.mxu0 0
    %1842 = vmatpush1.bf16.xpose.msra.mxu0 %v1762
    %1843 = vmatprep.subr.bf16.mxu0 0
    %1844 = vmatpush1.bf16.xpose.msra.mxu0 %v1765
    %1845 = vmatprep.subr.bf16.mxu0 0
    %1846 = vmatpush1.bf16.xpose.msra.mxu0 %v1768
    %1847 = vmatprep.subr.bf16.mxu0 0
    %1848 = vmatpush1.bf16.xpose.msra.mxu0 %v1771
    %1849 = vmatprep.subr.bf16.mxu0 0
    %1850 = vmatpush1.bf16.xpose.msra.mxu0 %v1774
    %1851 = vmatprep.subr.bf16.mxu0 0
    %1852 = vmatpush1.bf16.xpose.msra.mxu0 %v1777
    %1853 = vmatprep.subr.bf16.mxu0 0
    %1854 = vmatpush1.bf16.xpose.msra.mxu0 %v1780
    %1855 = vmatprep.mubr.bf16.mxu0 0
    %1856 = vmatmul.mubr.bf16.gmra.mrb[0].mxu0 %v1684
    %v1857 = vpop.f32.mrb[0].mxu0
    %v1858 = vadd.f32 %v1681, %v1857
    %v1859 = vpop.f32.mrb[0].mxu0
    %v1860 = vadd.f32 %v1681, %v1859
    %v1861 = vpop.f32.mrb[0].mxu0
    %v1862 = vpop.f32.mrb[0].mxu0
    %1863 = vdwg.mxu0
    %1864 = vst [vmem:[#allocation2] sm:$0xff] %v1817
    %1865 = vst [vmem:[#allocation2 + $0x8] sm:$0xff] %v1819
    %1866 = vst [vmem:[#allocation2 + $0x10] sm:$0xff] %v1858
    %1867 = vst [vmem:[#allocation2 + $0x18] sm:$0xff] %v1860
    // Predicated region
    $region38: #{mlp_forward.1} parent=1 // pred_check
      _
    $region39: #{mlp_forward.1} parent=1 // pred_check_branch
      %1869 = sbr.rel (0) target = $region41
    $region40: #{mlp_forward.1} parent=1 // pred_region
      %s1871 = ssub.s32 512, 512
      %1872 = vsyncadd [#allocation3], %s1871
      %s1874 = sshll.u32 [#allocation2], 4
      %s1875 = int_to_ptr.vmem [resolvable:$true] %s1874
      %1877 = dma.vmem_to_hbm [thread:$0]  %s1875, 512, %s9, [#allocation3]
    $region41: #{mlp_forward.1} parent=1 // pred_fallthru
      _
    // Predicated region
    $region42: #{mlp_forward.1} parent=1 // pred_check
      _
    $region43: #{mlp_forward.1} parent=1 // pred_check_branch
      %1879 = sbr.rel (0) target = $region45
    $region44: #{mlp_forward.1} parent=1 // pred_region
      %1880 = dma.done [#allocation3], 512
    $region45: #{mlp_forward.1} parent=1 // pred_fallthru
      _
    %1881 = vsyncpa [#allocation3], 1

</llo_original>
